<compile_context>
chip_gen: v6e
topology: v6e:2x2x1
jax: 0.10.0
libtpu: 0.0.40
codegen_flags: <defaults>
</compile_context>

<pallas_src>
import functools

import jax
import jax.numpy as jnp
from jax.experimental import pallas as pl
from jax.experimental.pallas import tpu as pltpu


def _residual_block_kernel(x_ref, col_ref, row_ref, w1_ref, b1_ref,
                           w2_ref, b2_ref, o_ref, *, H, W):
    HW = H * W
    eps = 1e-5

    x = x_ref[0]                       # (C, HW) f32
    C = x.shape[0]

    col = col_ref[...]                 # (1, HW) int32: j = p % W
    row = row_ref[...]                 # (1, HW) int32: i = p // W
    first_col = col == 0
    last_col = col == (W - 1)
    first_row = row == 0
    last_row = row == (H - 1)

    def lane_roll(t, shift):
        # np.roll semantics along the flattened (lane) axis; static shift.
        return pltpu.roll(t, shift=shift % HW, axis=1)

    def hshift(t, oj):
        # value at column j+oj with ReflectionPad2d(1) semantics
        if oj == 0:
            return t
        t_prev = lane_roll(t, 1)       # reads p - 1  (column j-1)
        t_next = lane_roll(t, -1)      # reads p + 1  (column j+1)
        if oj == 1:
            return jnp.where(last_col, t_prev, t_next)
        return jnp.where(first_col, t_next, t_prev)

    def vshift(t, oi):
        # value at row i+oi with reflection
        if oi == 0:
            return t
        t_up = lane_roll(t, W)         # reads p - W  (row i-1)
        t_dn = lane_roll(t, -W)        # reads p + W  (row i+1)
        if oi == 1:
            return jnp.where(last_row, t_up, t_dn)
        return jnp.where(first_row, t_dn, t_up)

    def conv3x3(t, w_ref, b_ref):
        # t: (C, HW) f32 ; w_ref: (9, C, C) bf16, tap index = di*3 + dj
        acc = jnp.zeros((C, HW), jnp.float32)
        for dj in range(3):
            th = hshift(t, dj - 1)
            for di in range(3):
                tap = vshift(th, di - 1).astype(jnp.bfloat16)
                acc = acc + jnp.dot(w_ref[di * 3 + dj], tap,
                                    preferred_element_type=jnp.float32)
        return acc + b_ref[...]        # bias (C, 1) broadcasts over lanes

    def instance_norm(y):
        # InstanceNorm2d(affine=False), biased variance, single stats pass
        inv_n = 1.0 / float(HW)
        mean = jnp.sum(y, axis=1, keepdims=True) * inv_n
        ex2 = jnp.sum(y * y, axis=1, keepdims=True) * inv_n
        var = jnp.maximum(ex2 - mean * mean, 0.0)
        return (y - mean) * jax.lax.rsqrt(var + eps)

    h = conv3x3(x, w1_ref, b1_ref)             # conv1 (+bias)
    h = jnp.maximum(instance_norm(h), 0.0)     # IN1 + ReLU
    h = conv3x3(h, w2_ref, b2_ref)             # conv2 (+bias)
    h = instance_norm(h)                       # IN2
    o_ref[0] = (x + h).astype(o_ref.dtype)     # residual add


def residual_block(x, w1, b1, w2, b2):
    """x: (B, C, H, W) f32; w*: (C, C, 3, 3); b*: (C,).  Requires H, W >= 2."""
    B, C, H, W = x.shape
    HW = H * W

    x2 = x.reshape(B, C, HW)

    def taps(w):
        # (C_out, C_in, 3, 3) -> (9, C_out, C_in) with tap index = di*3 + dj
        return jnp.transpose(w, (2, 3, 0, 1)).reshape(9, C, C).astype(jnp.bfloat16)

    w1t, w2t = taps(w1), taps(w2)
    b1c = b1.reshape(C, 1).astype(jnp.float32)
    b2c = b2.reshape(C, 1).astype(jnp.float32)

    pos = jnp.arange(HW, dtype=jnp.int32)
    col_idx = (pos % W).reshape(1, HW)
    row_idx = (pos // W).reshape(1, HW)

    # VMEM budget: double-buffered in/out image blocks + tap weights +
    # in-kernel temporaries; clamped so it is legal on v5e/v6e (128 MiB) and
    # v7x (64 MiB physical).
    act_bytes = C * HW * 4
    est = (4 * act_bytes            # 2x double-buffered in + out blocks
           + 12 * act_bytes         # in-kernel f32/bf16 temporaries (x, taps, acc, h)
           + 4 * 9 * C * C * 2      # bf16 tap weights (x2 convs, double-buffered)
           + (2 << 20))             # headroom / internal scratch
    vmem_limit = int(min(max(est, 16 << 20), 64 << 20))

    out2 = pl.pallas_call(
        functools.partial(_residual_block_kernel, H=H, W=W),
        out_shape=jax.ShapeDtypeStruct((B, C, HW), x.dtype),
        grid=(B,),
        in_specs=[
            pl.BlockSpec((1, C, HW), lambda b: (b, 0, 0)),
            pl.BlockSpec((1, HW), lambda b: (0, 0)),
            pl.BlockSpec((1, HW), lambda b: (0, 0)),
            pl.BlockSpec((9, C, C), lambda b: (0, 0, 0)),
            pl.BlockSpec((C, 1), lambda b: (0, 0)),
            pl.BlockSpec((9, C, C), lambda b: (0, 0, 0)),
            pl.BlockSpec((C, 1), lambda b: (0, 0)),
        ],
        out_specs=pl.BlockSpec((1, C, HW), lambda b: (b, 0, 0)),
        compiler_params=pltpu.CompilerParams(
            dimension_semantics=("parallel",),
            vmem_limit_bytes=vmem_limit),
    )(x2, col_idx, row_idx, w1t, b1c, w2t, b2c)

    return out2.reshape(B, C, H, W)


def ref_residual_block(x, w1, b1, w2, b2, eps=1e-5, conv_dtype=jnp.float32):
    """Pure-JAX reference. conv_dtype=bfloat16 matches the kernel's MXU operand
    precision (f32 accumulation either way)."""
    def conv(t, w, b):
        tp = jnp.pad(t.astype(conv_dtype), ((0, 0), (0, 0), (1, 1), (1, 1)),
                     mode="reflect")
        out = jax.lax.conv_general_dilated(
            tp, w.astype(conv_dtype), window_strides=(1, 1), padding="VALID",
            dimension_numbers=("NCHW", "OIHW", "NCHW"),
            preferred_element_type=jnp.float32)
        return out + b[None, :, None, None]

    def inorm(t):
        mean = t.mean(axis=(2, 3), keepdims=True)
        var = ((t - mean) ** 2).mean(axis=(2, 3), keepdims=True)
        return (t - mean) / jnp.sqrt(var + eps)

    h = jax.nn.relu(inorm(conv(x, w1, b1)))
    h = inorm(conv(h, w2, b2))
    return x + h


if __name__ == "__main__":
    B, C, H, W = 2, 4, 16, 16
    key = jax.random.PRNGKey(0)
    kx, kw1, kb1, kw2, kb2 = jax.random.split(key, 5)

    x = jax.random.normal(kx, (B, C, H, W), dtype=jnp.float32)

    # PyTorch-style uniform(-1/sqrt(fan_in), 1/sqrt(fan_in)) init
    fan_in = C * 3 * 3
    bound = 1.0 / (fan_in ** 0.5)
    w1 = jax.random.uniform(kw1, (C, C, 3, 3), jnp.float32, -bound, bound)
    b1 = jax.random.uniform(kb1, (C,), jnp.float32, -bound, bound)
    w2 = jax.random.uniform(kw2, (C, C, 3, 3), jnp.float32, -bound, bound)
    b2 = jax.random.uniform(kb2, (C,), jnp.float32, -bound, bound)

    out = jax.block_until_ready(residual_block(x, w1, b1, w2, b2))
    assert out.shape == (B, C, H, W)

    # Structural check vs a reference using the same bf16 conv operands.
    ref_b = jax.block_until_ready(
        ref_residual_block(x, w1, b1, w2, b2, conv_dtype=jnp.bfloat16))
    err_b = float(jnp.max(jnp.abs(out - ref_b)))
    assert jnp.allclose(out, ref_b, atol=5e-3, rtol=5e-3), (
        f"bf16-matched ref max abs diff {err_b}")

    # Semantic check vs the full-f32 reference (looser: bf16 MXU operands).
    ref_f = jax.block_until_ready(
        ref_residual_block(x, w1, b1, w2, b2, conv_dtype=jnp.float32))
    err_f = float(jnp.max(jnp.abs(out - ref_f)))
    assert jnp.allclose(out, ref_f, atol=5e-2, rtol=5e-2), (
        f"f32 ref max abs diff {err_f}")

    print("KERNEL_OK")
</pallas_src>

<mosaic_0001>
module attributes {stable_mosaic.version = 11 : i64} {
  func.func @_residual_block_kernel(%arg0: i32, %arg1: memref<1x4x256xf32, #tpu.memory_space<vmem>>, %arg2: memref<1x256xi32, #tpu.memory_space<vmem>>, %arg3: memref<1x256xi32, #tpu.memory_space<vmem>>, %arg4: memref<9x4x4xbf16, #tpu.memory_space<vmem>>, %arg5: memref<4x1xf32, #tpu.memory_space<vmem>>, %arg6: memref<9x4x4xbf16, #tpu.memory_space<vmem>>, %arg7: memref<4x1xf32, #tpu.memory_space<vmem>>, %arg8: memref<1x4x256xf32, #tpu.memory_space<vmem>>) attributes {dimension_semantics = [#tpu.dimension_semantics<parallel>], iteration_bounds = array<i64: 2>, scalar_prefetch = 0 : i64, scratch_operands = 0 : i64, tpu.core_type = #tpu.core_type<tc>, window_params = [{transform_indices = @transform_0, window_bounds = array<i64: 1, 4, 256>}, {pipeline_mode = #tpu.pipeline_mode<synchronous>, transform_indices = @transform_1, window_bounds = array<i64: 1, 256>}, {pipeline_mode = #tpu.pipeline_mode<synchronous>, transform_indices = @transform_2, window_bounds = array<i64: 1, 256>}, {pipeline_mode = #tpu.pipeline_mode<synchronous>, transform_indices = @transform_3, window_bounds = array<i64: 9, 4, 4>}, {pipeline_mode = #tpu.pipeline_mode<synchronous>, transform_indices = @transform_4, window_bounds = array<i64: 4, 1>}, {pipeline_mode = #tpu.pipeline_mode<synchronous>, transform_indices = @transform_5, window_bounds = array<i64: 9, 4, 4>}, {pipeline_mode = #tpu.pipeline_mode<synchronous>, transform_indices = @transform_6, window_bounds = array<i64: 4, 1>}, {transform_indices = @transform_7, window_bounds = array<i64: 1, 4, 256>}]} {
    %c0 = arith.constant 0 : index
    %c0_0 = arith.constant 0 : index
    %c0_1 = arith.constant 0 : index
    %0 = vector.load %arg1[%c0, %c0_0, %c0_1] : memref<1x4x256xf32, #tpu.memory_space<vmem>>, vector<1x4x256xf32>
    %1 = vector.shape_cast %0 : vector<1x4x256xf32> to vector<4x256xf32>
    %c0_2 = arith.constant 0 : index
    %c0_3 = arith.constant 0 : index
    %2 = vector.load %arg2[%c0_2, %c0_3] : memref<1x256xi32, #tpu.memory_space<vmem>>, vector<1x256xi32>
    %c0_4 = arith.constant 0 : index
    %c0_5 = arith.constant 0 : index
    %3 = vector.load %arg3[%c0_4, %c0_5] : memref<1x256xi32, #tpu.memory_space<vmem>>, vector<1x256xi32>
    %c0_i32 = arith.constant 0 : i32
    %4 = vector.broadcast %c0_i32 : i32 to vector<1x256xi32>
    %5 = arith.cmpi eq, %2, %4 : vector<1x256xi32>
    %c15_i32 = arith.constant 15 : i32
    %6 = vector.broadcast %c15_i32 : i32 to vector<1x256xi32>
    %7 = arith.cmpi eq, %2, %6 : vector<1x256xi32>
    %c0_i32_6 = arith.constant 0 : i32
    %8 = vector.broadcast %c0_i32_6 : i32 to vector<1x256xi32>
    %9 = arith.cmpi eq, %3, %8 : vector<1x256xi32>
    %c15_i32_7 = arith.constant 15 : i32
    %10 = vector.broadcast %c15_i32_7 : i32 to vector<1x256xi32>
    %11 = arith.cmpi eq, %3, %10 : vector<1x256xi32>
    %cst = arith.constant 0.000000e+00 : f32
    %12 = vector.broadcast %cst : f32 to vector<4x256xf32>
    %c1_i32 = arith.constant 1 : i32
    %13 = tpu.dynamic_rotate %1 by %c1_i32 dim 1 : vector<4x256xf32>, i32 -> vector<4x256xf32>
    %c255_i32 = arith.constant 255 : i32
    %14 = tpu.dynamic_rotate %1 by %c255_i32 dim 1 : vector<4x256xf32>, i32 -> vector<4x256xf32>
    %15 = vector.shape_cast %5 : vector<1x256xi1> to vector<1x256xi1>
    %16 = vector.broadcast %15 : vector<1x256xi1> to vector<4x256xi1>
    %17 = arith.select %16, %14, %13 : vector<4x256xi1>, vector<4x256xf32>
    %c16_i32 = arith.constant 16 : i32
    %18 = tpu.dynamic_rotate %17 by %c16_i32 dim 1 : vector<4x256xf32>, i32 -> vector<4x256xf32>
    %c240_i32 = arith.constant 240 : i32
    %19 = tpu.dynamic_rotate %17 by %c240_i32 dim 1 : vector<4x256xf32>, i32 -> vector<4x256xf32>
    %20 = vector.shape_cast %9 : vector<1x256xi1> to vector<1x256xi1>
    %21 = vector.broadcast %20 : vector<1x256xi1> to vector<4x256xi1>
    %22 = arith.select %21, %19, %18 : vector<4x256xi1>, vector<4x256xf32>
    %23 = arith.truncf %22 : vector<4x256xf32> to vector<4x256xbf16>
    %c0_8 = arith.constant 0 : index
    %c0_9 = arith.constant 0 : index
    %c0_10 = arith.constant 0 : index
    %24 = vector.load %arg4[%c0_8, %c0_9, %c0_10] : memref<9x4x4xbf16, #tpu.memory_space<vmem>>, vector<1x4x4xbf16>
    %25 = vector.shape_cast %24 : vector<1x4x4xbf16> to vector<4x4xbf16>
    %cst_11 = arith.constant dense<0.000000e+00> : vector<4x256xf32>
    %26 = tpu.matmul %25, %23, %cst_11 {dimension_numbers = #tpu.dot_dimension_numbers<[1], [0], [0], [1], [0, 0, 1, 1], [], []>} : vector<4x4xbf16>, vector<4x256xbf16>, vector<4x256xf32> -> vector<4x256xf32>
    %27 = arith.addf %12, %26 : vector<4x256xf32>
    %28 = arith.truncf %17 : vector<4x256xf32> to vector<4x256xbf16>
    %c3 = arith.constant 3 : index
    %c0_12 = arith.constant 0 : index
    %c0_13 = arith.constant 0 : index
    %29 = vector.load %arg4[%c3, %c0_12, %c0_13] : memref<9x4x4xbf16, #tpu.memory_space<vmem>>, vector<1x4x4xbf16>
    %30 = vector.shape_cast %29 : vector<1x4x4xbf16> to vector<4x4xbf16>
    %cst_14 = arith.constant dense<0.000000e+00> : vector<4x256xf32>
    %31 = tpu.matmul %30, %28, %cst_14 {dimension_numbers = #tpu.dot_dimension_numbers<[1], [0], [0], [1], [0, 0, 1, 1], [], []>} : vector<4x4xbf16>, vector<4x256xbf16>, vector<4x256xf32> -> vector<4x256xf32>
    %32 = arith.addf %27, %31 : vector<4x256xf32>
    %c16_i32_15 = arith.constant 16 : i32
    %33 = tpu.dynamic_rotate %17 by %c16_i32_15 dim 1 : vector<4x256xf32>, i32 -> vector<4x256xf32>
    %c240_i32_16 = arith.constant 240 : i32
    %34 = tpu.dynamic_rotate %17 by %c240_i32_16 dim 1 : vector<4x256xf32>, i32 -> vector<4x256xf32>
    %35 = vector.shape_cast %11 : vector<1x256xi1> to vector<1x256xi1>
    %36 = vector.broadcast %35 : vector<1x256xi1> to vector<4x256xi1>
    %37 = arith.select %36, %33, %34 : vector<4x256xi1>, vector<4x256xf32>
    %38 = arith.truncf %37 : vector<4x256xf32> to vector<4x256xbf16>
    %c6 = arith.constant 6 : index
    %c0_17 = arith.constant 0 : index
    %c0_18 = arith.constant 0 : index
    %39 = vector.load %arg4[%c6, %c0_17, %c0_18] : memref<9x4x4xbf16, #tpu.memory_space<vmem>>, vector<1x4x4xbf16>
    %40 = vector.shape_cast %39 : vector<1x4x4xbf16> to vector<4x4xbf16>
    %cst_19 = arith.constant dense<0.000000e+00> : vector<4x256xf32>
    %41 = tpu.matmul %40, %38, %cst_19 {dimension_numbers = #tpu.dot_dimension_numbers<[1], [0], [0], [1], [0, 0, 1, 1], [], []>} : vector<4x4xbf16>, vector<4x256xbf16>, vector<4x256xf32> -> vector<4x256xf32>
    %42 = arith.addf %32, %41 : vector<4x256xf32>
    %c16_i32_20 = arith.constant 16 : i32
    %43 = tpu.dynamic_rotate %1 by %c16_i32_20 dim 1 : vector<4x256xf32>, i32 -> vector<4x256xf32>
    %c240_i32_21 = arith.constant 240 : i32
    %44 = tpu.dynamic_rotate %1 by %c240_i32_21 dim 1 : vector<4x256xf32>, i32 -> vector<4x256xf32>
    %45 = vector.shape_cast %9 : vector<1x256xi1> to vector<1x256xi1>
    %46 = vector.broadcast %45 : vector<1x256xi1> to vector<4x256xi1>
    %47 = arith.select %46, %44, %43 : vector<4x256xi1>, vector<4x256xf32>
    %48 = arith.truncf %47 : vector<4x256xf32> to vector<4x256xbf16>
    %c1 = arith.constant 1 : index
    %c0_22 = arith.constant 0 : index
    %c0_23 = arith.constant 0 : index
    %49 = vector.load %arg4[%c1, %c0_22, %c0_23] : memref<9x4x4xbf16, #tpu.memory_space<vmem>>, vector<1x4x4xbf16>
    %50 = vector.shape_cast %49 : vector<1x4x4xbf16> to vector<4x4xbf16>
    %cst_24 = arith.constant dense<0.000000e+00> : vector<4x256xf32>
    %51 = tpu.matmul %50, %48, %cst_24 {dimension_numbers = #tpu.dot_dimension_numbers<[1], [0], [0], [1], [0, 0, 1, 1], [], []>} : vector<4x4xbf16>, vector<4x256xbf16>, vector<4x256xf32> -> vector<4x256xf32>
    %52 = arith.addf %42, %51 : vector<4x256xf32>
    %53 = arith.truncf %1 : vector<4x256xf32> to vector<4x256xbf16>
    %c4 = arith.constant 4 : index
    %c0_25 = arith.constant 0 : index
    %c0_26 = arith.constant 0 : index
    %54 = vector.load %arg4[%c4, %c0_25, %c0_26] : memref<9x4x4xbf16, #tpu.memory_space<vmem>>, vector<1x4x4xbf16>
    %55 = vector.shape_cast %54 : vector<1x4x4xbf16> to vector<4x4xbf16>
    %cst_27 = arith.constant dense<0.000000e+00> : vector<4x256xf32>
    %56 = tpu.matmul %55, %53, %cst_27 {dimension_numbers = #tpu.dot_dimension_numbers<[1], [0], [0], [1], [0, 0, 1, 1], [], []>} : vector<4x4xbf16>, vector<4x256xbf16>, vector<4x256xf32> -> vector<4x256xf32>
    %57 = arith.addf %52, %56 : vector<4x256xf32>
    %c16_i32_28 = arith.constant 16 : i32
    %58 = tpu.dynamic_rotate %1 by %c16_i32_28 dim 1 : vector<4x256xf32>, i32 -> vector<4x256xf32>
    %c240_i32_29 = arith.constant 240 : i32
    %59 = tpu.dynamic_rotate %1 by %c240_i32_29 dim 1 : vector<4x256xf32>, i32 -> vector<4x256xf32>
    %60 = vector.shape_cast %11 : vector<1x256xi1> to vector<1x256xi1>
    %61 = vector.broadcast %60 : vector<1x256xi1> to vector<4x256xi1>
    %62 = arith.select %61, %58, %59 : vector<4x256xi1>, vector<4x256xf32>
    %63 = arith.truncf %62 : vector<4x256xf32> to vector<4x256xbf16>
    %c7 = arith.constant 7 : index
    %c0_30 = arith.constant 0 : index
    %c0_31 = arith.constant 0 : index
    %64 = vector.load %arg4[%c7, %c0_30, %c0_31] : memref<9x4x4xbf16, #tpu.memory_space<vmem>>, vector<1x4x4xbf16>
    %65 = vector.shape_cast %64 : vector<1x4x4xbf16> to vector<4x4xbf16>
    %cst_32 = arith.constant dense<0.000000e+00> : vector<4x256xf32>
    %66 = tpu.matmul %65, %63, %cst_32 {dimension_numbers = #tpu.dot_dimension_numbers<[1], [0], [0], [1], [0, 0, 1, 1], [], []>} : vector<4x4xbf16>, vector<4x256xbf16>, vector<4x256xf32> -> vector<4x256xf32>
    %67 = arith.addf %57, %66 : vector<4x256xf32>
    %c1_i32_33 = arith.constant 1 : i32
    %68 = tpu.dynamic_rotate %1 by %c1_i32_33 dim 1 : vector<4x256xf32>, i32 -> vector<4x256xf32>
    %c255_i32_34 = arith.constant 255 : i32
    %69 = tpu.dynamic_rotate %1 by %c255_i32_34 dim 1 : vector<4x256xf32>, i32 -> vector<4x256xf32>
    %70 = vector.shape_cast %7 : vector<1x256xi1> to vector<1x256xi1>
    %71 = vector.broadcast %70 : vector<1x256xi1> to vector<4x256xi1>
    %72 = arith.select %71, %68, %69 : vector<4x256xi1>, vector<4x256xf32>
    %c16_i32_35 = arith.constant 16 : i32
    %73 = tpu.dynamic_rotate %72 by %c16_i32_35 dim 1 : vector<4x256xf32>, i32 -> vector<4x256xf32>
    %c240_i32_36 = arith.constant 240 : i32
    %74 = tpu.dynamic_rotate %72 by %c240_i32_36 dim 1 : vector<4x256xf32>, i32 -> vector<4x256xf32>
    %75 = vector.shape_cast %9 : vector<1x256xi1> to vector<1x256xi1>
    %76 = vector.broadcast %75 : vector<1x256xi1> to vector<4x256xi1>
    %77 = arith.select %76, %74, %73 : vector<4x256xi1>, vector<4x256xf32>
    %78 = arith.truncf %77 : vector<4x256xf32> to vector<4x256xbf16>
    %c2 = arith.constant 2 : index
    %c0_37 = arith.constant 0 : index
    %c0_38 = arith.constant 0 : index
    %79 = vector.load %arg4[%c2, %c0_37, %c0_38] : memref<9x4x4xbf16, #tpu.memory_space<vmem>>, vector<1x4x4xbf16>
    %80 = vector.shape_cast %79 : vector<1x4x4xbf16> to vector<4x4xbf16>
    %cst_39 = arith.constant dense<0.000000e+00> : vector<4x256xf32>
    %81 = tpu.matmul %80, %78, %cst_39 {dimension_numbers = #tpu.dot_dimension_numbers<[1], [0], [0], [1], [0, 0, 1, 1], [], []>} : vector<4x4xbf16>, vector<4x256xbf16>, vector<4x256xf32> -> vector<4x256xf32>
    %82 = arith.addf %67, %81 : vector<4x256xf32>
    %83 = arith.truncf %72 : vector<4x256xf32> to vector<4x256xbf16>
    %c5 = arith.constant 5 : index
    %c0_40 = arith.constant 0 : index
    %c0_41 = arith.constant 0 : index
    %84 = vector.load %arg4[%c5, %c0_40, %c0_41] : memref<9x4x4xbf16, #tpu.memory_space<vmem>>, vector<1x4x4xbf16>
    %85 = vector.shape_cast %84 : vector<1x4x4xbf16> to vector<4x4xbf16>
    %cst_42 = arith.constant dense<0.000000e+00> : vector<4x256xf32>
    %86 = tpu.matmul %85, %83, %cst_42 {dimension_numbers = #tpu.dot_dimension_numbers<[1], [0], [0], [1], [0, 0, 1, 1], [], []>} : vector<4x4xbf16>, vector<4x256xbf16>, vector<4x256xf32> -> vector<4x256xf32>
    %87 = arith.addf %82, %86 : vector<4x256xf32>
    %c16_i32_43 = arith.constant 16 : i32
    %88 = tpu.dynamic_rotate %72 by %c16_i32_43 dim 1 : vector<4x256xf32>, i32 -> vector<4x256xf32>
    %c240_i32_44 = arith.constant 240 : i32
    %89 = tpu.dynamic_rotate %72 by %c240_i32_44 dim 1 : vector<4x256xf32>, i32 -> vector<4x256xf32>
    %90 = vector.shape_cast %11 : vector<1x256xi1> to vector<1x256xi1>
    %91 = vector.broadcast %90 : vector<1x256xi1> to vector<4x256xi1>
    %92 = arith.select %91, %88, %89 : vector<4x256xi1>, vector<4x256xf32>
    %93 = arith.truncf %92 : vector<4x256xf32> to vector<4x256xbf16>
    %c8 = arith.constant 8 : index
    %c0_45 = arith.constant 0 : index
    %c0_46 = arith.constant 0 : index
    %94 = vector.load %arg4[%c8, %c0_45, %c0_46] : memref<9x4x4xbf16, #tpu.memory_space<vmem>>, vector<1x4x4xbf16>
    %95 = vector.shape_cast %94 : vector<1x4x4xbf16> to vector<4x4xbf16>
    %cst_47 = arith.constant dense<0.000000e+00> : vector<4x256xf32>
    %96 = tpu.matmul %95, %93, %cst_47 {dimension_numbers = #tpu.dot_dimension_numbers<[1], [0], [0], [1], [0, 0, 1, 1], [], []>} : vector<4x4xbf16>, vector<4x256xbf16>, vector<4x256xf32> -> vector<4x256xf32>
    %97 = arith.addf %87, %96 : vector<4x256xf32>
    %c0_48 = arith.constant 0 : index
    %c0_49 = arith.constant 0 : index
    %98 = vector.load %arg5[%c0_48, %c0_49] : memref<4x1xf32, #tpu.memory_space<vmem>>, vector<4x1xf32>
    %99 = vector.broadcast %98 : vector<4x1xf32> to vector<4x256xf32>
    %100 = arith.addf %97, %99 : vector<4x256xf32>
    %cst_50 = arith.constant dense<0.000000e+00> : vector<4xf32>
    %101 = vector.multi_reduction <add>, %100, %cst_50 [1] : vector<4x256xf32> to vector<4xf32>
    %102 = vector.shape_cast %101 : vector<4xf32> to vector<4x1xf32>
    %cst_51 = arith.constant 3.906250e-03 : f32
    %103 = vector.broadcast %cst_51 : f32 to vector<4x1xf32>
    %104 = arith.mulf %102, %103 : vector<4x1xf32>
    %105 = arith.mulf %100, %100 : vector<4x256xf32>
    %cst_52 = arith.constant dense<0.000000e+00> : vector<4xf32>
    %106 = vector.multi_reduction <add>, %105, %cst_52 [1] : vector<4x256xf32> to vector<4xf32>
    %107 = vector.shape_cast %106 : vector<4xf32> to vector<4x1xf32>
    %cst_53 = arith.constant 3.906250e-03 : f32
    %108 = vector.broadcast %cst_53 : f32 to vector<4x1xf32>
    %109 = arith.mulf %107, %108 : vector<4x1xf32>
    %110 = arith.mulf %104, %104 : vector<4x1xf32>
    %111 = arith.subf %109, %110 : vector<4x1xf32>
    %cst_54 = arith.constant 0.000000e+00 : f32
    %112 = vector.broadcast %cst_54 : f32 to vector<4x1xf32>
    %113 = arith.maximumf %111, %112 : vector<4x1xf32>
    %114 = vector.broadcast %104 : vector<4x1xf32> to vector<4x256xf32>
    %115 = arith.subf %100, %114 : vector<4x256xf32>
    %cst_55 = arith.constant 9.99999974E-6 : f32
    %116 = vector.broadcast %cst_55 : f32 to vector<4x1xf32>
    %117 = arith.addf %113, %116 : vector<4x1xf32>
    %118 = math.rsqrt %117 : vector<4x1xf32>
    %119 = vector.broadcast %118 : vector<4x1xf32> to vector<4x256xf32>
    %120 = arith.mulf %115, %119 : vector<4x256xf32>
    %cst_56 = arith.constant 0.000000e+00 : f32
    %121 = vector.broadcast %cst_56 : f32 to vector<4x256xf32>
    %122 = arith.maximumf %120, %121 : vector<4x256xf32>
    %cst_57 = arith.constant 0.000000e+00 : f32
    %123 = vector.broadcast %cst_57 : f32 to vector<4x256xf32>
    %c1_i32_58 = arith.constant 1 : i32
    %124 = tpu.dynamic_rotate %122 by %c1_i32_58 dim 1 : vector<4x256xf32>, i32 -> vector<4x256xf32>
    %c255_i32_59 = arith.constant 255 : i32
    %125 = tpu.dynamic_rotate %122 by %c255_i32_59 dim 1 : vector<4x256xf32>, i32 -> vector<4x256xf32>
    %126 = vector.shape_cast %5 : vector<1x256xi1> to vector<1x256xi1>
    %127 = vector.broadcast %126 : vector<1x256xi1> to vector<4x256xi1>
    %128 = arith.select %127, %125, %124 : vector<4x256xi1>, vector<4x256xf32>
    %c16_i32_60 = arith.constant 16 : i32
    %129 = tpu.dynamic_rotate %128 by %c16_i32_60 dim 1 : vector<4x256xf32>, i32 -> vector<4x256xf32>
    %c240_i32_61 = arith.constant 240 : i32
    %130 = tpu.dynamic_rotate %128 by %c240_i32_61 dim 1 : vector<4x256xf32>, i32 -> vector<4x256xf32>
    %131 = vector.shape_cast %9 : vector<1x256xi1> to vector<1x256xi1>
    %132 = vector.broadcast %131 : vector<1x256xi1> to vector<4x256xi1>
    %133 = arith.select %132, %130, %129 : vector<4x256xi1>, vector<4x256xf32>
    %134 = arith.truncf %133 : vector<4x256xf32> to vector<4x256xbf16>
    %c0_62 = arith.constant 0 : index
    %c0_63 = arith.constant 0 : index
    %c0_64 = arith.constant 0 : index
    %135 = vector.load %arg6[%c0_62, %c0_63, %c0_64] : memref<9x4x4xbf16, #tpu.memory_space<vmem>>, vector<1x4x4xbf16>
    %136 = vector.shape_cast %135 : vector<1x4x4xbf16> to vector<4x4xbf16>
    %cst_65 = arith.constant dense<0.000000e+00> : vector<4x256xf32>
    %137 = tpu.matmul %136, %134, %cst_65 {dimension_numbers = #tpu.dot_dimension_numbers<[1], [0], [0], [1], [0, 0, 1, 1], [], []>} : vector<4x4xbf16>, vector<4x256xbf16>, vector<4x256xf32> -> vector<4x256xf32>
    %138 = arith.addf %123, %137 : vector<4x256xf32>
    %139 = arith.truncf %128 : vector<4x256xf32> to vector<4x256xbf16>
    %c3_66 = arith.constant 3 : index
    %c0_67 = arith.constant 0 : index
    %c0_68 = arith.constant 0 : index
    %140 = vector.load %arg6[%c3_66, %c0_67, %c0_68] : memref<9x4x4xbf16, #tpu.memory_space<vmem>>, vector<1x4x4xbf16>
    %141 = vector.shape_cast %140 : vector<1x4x4xbf16> to vector<4x4xbf16>
    %cst_69 = arith.constant dense<0.000000e+00> : vector<4x256xf32>
    %142 = tpu.matmul %141, %139, %cst_69 {dimension_numbers = #tpu.dot_dimension_numbers<[1], [0], [0], [1], [0, 0, 1, 1], [], []>} : vector<4x4xbf16>, vector<4x256xbf16>, vector<4x256xf32> -> vector<4x256xf32>
    %143 = arith.addf %138, %142 : vector<4x256xf32>
    %c16_i32_70 = arith.constant 16 : i32
    %144 = tpu.dynamic_rotate %128 by %c16_i32_70 dim 1 : vector<4x256xf32>, i32 -> vector<4x256xf32>
    %c240_i32_71 = arith.constant 240 : i32
    %145 = tpu.dynamic_rotate %128 by %c240_i32_71 dim 1 : vector<4x256xf32>, i32 -> vector<4x256xf32>
    %146 = vector.shape_cast %11 : vector<1x256xi1> to vector<1x256xi1>
    %147 = vector.broadcast %146 : vector<1x256xi1> to vector<4x256xi1>
    %148 = arith.select %147, %144, %145 : vector<4x256xi1>, vector<4x256xf32>
    %149 = arith.truncf %148 : vector<4x256xf32> to vector<4x256xbf16>
    %c6_72 = arith.constant 6 : index
    %c0_73 = arith.constant 0 : index
    %c0_74 = arith.constant 0 : index
    %150 = vector.load %arg6[%c6_72, %c0_73, %c0_74] : memref<9x4x4xbf16, #tpu.memory_space<vmem>>, vector<1x4x4xbf16>
    %151 = vector.shape_cast %150 : vector<1x4x4xbf16> to vector<4x4xbf16>
    %cst_75 = arith.constant dense<0.000000e+00> : vector<4x256xf32>
    %152 = tpu.matmul %151, %149, %cst_75 {dimension_numbers = #tpu.dot_dimension_numbers<[1], [0], [0], [1], [0, 0, 1, 1], [], []>} : vector<4x4xbf16>, vector<4x256xbf16>, vector<4x256xf32> -> vector<4x256xf32>
    %153 = arith.addf %143, %152 : vector<4x256xf32>
    %c16_i32_76 = arith.constant 16 : i32
    %154 = tpu.dynamic_rotate %122 by %c16_i32_76 dim 1 : vector<4x256xf32>, i32 -> vector<4x256xf32>
    %c240_i32_77 = arith.constant 240 : i32
    %155 = tpu.dynamic_rotate %122 by %c240_i32_77 dim 1 : vector<4x256xf32>, i32 -> vector<4x256xf32>
    %156 = vector.shape_cast %9 : vector<1x256xi1> to vector<1x256xi1>
    %157 = vector.broadcast %156 : vector<1x256xi1> to vector<4x256xi1>
    %158 = arith.select %157, %155, %154 : vector<4x256xi1>, vector<4x256xf32>
    %159 = arith.truncf %158 : vector<4x256xf32> to vector<4x256xbf16>
    %c1_78 = arith.constant 1 : index
    %c0_79 = arith.constant 0 : index
    %c0_80 = arith.constant 0 : index
    %160 = vector.load %arg6[%c1_78, %c0_79, %c0_80] : memref<9x4x4xbf16, #tpu.memory_space<vmem>>, vector<1x4x4xbf16>
    %161 = vector.shape_cast %160 : vector<1x4x4xbf16> to vector<4x4xbf16>
    %cst_81 = arith.constant dense<0.000000e+00> : vector<4x256xf32>
    %162 = tpu.matmul %161, %159, %cst_81 {dimension_numbers = #tpu.dot_dimension_numbers<[1], [0], [0], [1], [0, 0, 1, 1], [], []>} : vector<4x4xbf16>, vector<4x256xbf16>, vector<4x256xf32> -> vector<4x256xf32>
    %163 = arith.addf %153, %162 : vector<4x256xf32>
    %164 = arith.truncf %122 : vector<4x256xf32> to vector<4x256xbf16>
    %c4_82 = arith.constant 4 : index
    %c0_83 = arith.constant 0 : index
    %c0_84 = arith.constant 0 : index
    %165 = vector.load %arg6[%c4_82, %c0_83, %c0_84] : memref<9x4x4xbf16, #tpu.memory_space<vmem>>, vector<1x4x4xbf16>
    %166 = vector.shape_cast %165 : vector<1x4x4xbf16> to vector<4x4xbf16>
    %cst_85 = arith.constant dense<0.000000e+00> : vector<4x256xf32>
    %167 = tpu.matmul %166, %164, %cst_85 {dimension_numbers = #tpu.dot_dimension_numbers<[1], [0], [0], [1], [0, 0, 1, 1], [], []>} : vector<4x4xbf16>, vector<4x256xbf16>, vector<4x256xf32> -> vector<4x256xf32>
    %168 = arith.addf %163, %167 : vector<4x256xf32>
    %c16_i32_86 = arith.constant 16 : i32
    %169 = tpu.dynamic_rotate %122 by %c16_i32_86 dim 1 : vector<4x256xf32>, i32 -> vector<4x256xf32>
    %c240_i32_87 = arith.constant 240 : i32
    %170 = tpu.dynamic_rotate %122 by %c240_i32_87 dim 1 : vector<4x256xf32>, i32 -> vector<4x256xf32>
    %171 = vector.shape_cast %11 : vector<1x256xi1> to vector<1x256xi1>
    %172 = vector.broadcast %171 : vector<1x256xi1> to vector<4x256xi1>
    %173 = arith.select %172, %169, %170 : vector<4x256xi1>, vector<4x256xf32>
    %174 = arith.truncf %173 : vector<4x256xf32> to vector<4x256xbf16>
    %c7_88 = arith.constant 7 : index
    %c0_89 = arith.constant 0 : index
    %c0_90 = arith.constant 0 : index
    %175 = vector.load %arg6[%c7_88, %c0_89, %c0_90] : memref<9x4x4xbf16, #tpu.memory_space<vmem>>, vector<1x4x4xbf16>
    %176 = vector.shape_cast %175 : vector<1x4x4xbf16> to vector<4x4xbf16>
    %cst_91 = arith.constant dense<0.000000e+00> : vector<4x256xf32>
    %177 = tpu.matmul %176, %174, %cst_91 {dimension_numbers = #tpu.dot_dimension_numbers<[1], [0], [0], [1], [0, 0, 1, 1], [], []>} : vector<4x4xbf16>, vector<4x256xbf16>, vector<4x256xf32> -> vector<4x256xf32>
    %178 = arith.addf %168, %177 : vector<4x256xf32>
    %c1_i32_92 = arith.constant 1 : i32
    %179 = tpu.dynamic_rotate %122 by %c1_i32_92 dim 1 : vector<4x256xf32>, i32 -> vector<4x256xf32>
    %c255_i32_93 = arith.constant 255 : i32
    %180 = tpu.dynamic_rotate %122 by %c255_i32_93 dim 1 : vector<4x256xf32>, i32 -> vector<4x256xf32>
    %181 = vector.shape_cast %7 : vector<1x256xi1> to vector<1x256xi1>
    %182 = vector.broadcast %181 : vector<1x256xi1> to vector<4x256xi1>
    %183 = arith.select %182, %179, %180 : vector<4x256xi1>, vector<4x256xf32>
    %c16_i32_94 = arith.constant 16 : i32
    %184 = tpu.dynamic_rotate %183 by %c16_i32_94 dim 1 : vector<4x256xf32>, i32 -> vector<4x256xf32>
    %c240_i32_95 = arith.constant 240 : i32
    %185 = tpu.dynamic_rotate %183 by %c240_i32_95 dim 1 : vector<4x256xf32>, i32 -> vector<4x256xf32>
    %186 = vector.shape_cast %9 : vector<1x256xi1> to vector<1x256xi1>
    %187 = vector.broadcast %186 : vector<1x256xi1> to vector<4x256xi1>
    %188 = arith.select %187, %185, %184 : vector<4x256xi1>, vector<4x256xf32>
    %189 = arith.truncf %188 : vector<4x256xf32> to vector<4x256xbf16>
    %c2_96 = arith.constant 2 : index
    %c0_97 = arith.constant 0 : index
    %c0_98 = arith.constant 0 : index
    %190 = vector.load %arg6[%c2_96, %c0_97, %c0_98] : memref<9x4x4xbf16, #tpu.memory_space<vmem>>, vector<1x4x4xbf16>
    %191 = vector.shape_cast %190 : vector<1x4x4xbf16> to vector<4x4xbf16>
    %cst_99 = arith.constant dense<0.000000e+00> : vector<4x256xf32>
    %192 = tpu.matmul %191, %189, %cst_99 {dimension_numbers = #tpu.dot_dimension_numbers<[1], [0], [0], [1], [0, 0, 1, 1], [], []>} : vector<4x4xbf16>, vector<4x256xbf16>, vector<4x256xf32> -> vector<4x256xf32>
    %193 = arith.addf %178, %192 : vector<4x256xf32>
    %194 = arith.truncf %183 : vector<4x256xf32> to vector<4x256xbf16>
    %c5_100 = arith.constant 5 : index
    %c0_101 = arith.constant 0 : index
    %c0_102 = arith.constant 0 : index
    %195 = vector.load %arg6[%c5_100, %c0_101, %c0_102] : memref<9x4x4xbf16, #tpu.memory_space<vmem>>, vector<1x4x4xbf16>
    %196 = vector.shape_cast %195 : vector<1x4x4xbf16> to vector<4x4xbf16>
    %cst_103 = arith.constant dense<0.000000e+00> : vector<4x256xf32>
    %197 = tpu.matmul %196, %194, %cst_103 {dimension_numbers = #tpu.dot_dimension_numbers<[1], [0], [0], [1], [0, 0, 1, 1], [], []>} : vector<4x4xbf16>, vector<4x256xbf16>, vector<4x256xf32> -> vector<4x256xf32>
    %198 = arith.addf %193, %197 : vector<4x256xf32>
    %c16_i32_104 = arith.constant 16 : i32
    %199 = tpu.dynamic_rotate %183 by %c16_i32_104 dim 1 : vector<4x256xf32>, i32 -> vector<4x256xf32>
    %c240_i32_105 = arith.constant 240 : i32
    %200 = tpu.dynamic_rotate %183 by %c240_i32_105 dim 1 : vector<4x256xf32>, i32 -> vector<4x256xf32>
    %201 = vector.shape_cast %11 : vector<1x256xi1> to vector<1x256xi1>
    %202 = vector.broadcast %201 : vector<1x256xi1> to vector<4x256xi1>
    %203 = arith.select %202, %199, %200 : vector<4x256xi1>, vector<4x256xf32>
    %204 = arith.truncf %203 : vector<4x256xf32> to vector<4x256xbf16>
    %c8_106 = arith.constant 8 : index
    %c0_107 = arith.constant 0 : index
    %c0_108 = arith.constant 0 : index
    %205 = vector.load %arg6[%c8_106, %c0_107, %c0_108] : memref<9x4x4xbf16, #tpu.memory_space<vmem>>, vector<1x4x4xbf16>
    %206 = vector.shape_cast %205 : vector<1x4x4xbf16> to vector<4x4xbf16>
    %cst_109 = arith.constant dense<0.000000e+00> : vector<4x256xf32>
    %207 = tpu.matmul %206, %204, %cst_109 {dimension_numbers = #tpu.dot_dimension_numbers<[1], [0], [0], [1], [0, 0, 1, 1], [], []>} : vector<4x4xbf16>, vector<4x256xbf16>, vector<4x256xf32> -> vector<4x256xf32>
    %208 = arith.addf %198, %207 : vector<4x256xf32>
    %c0_110 = arith.constant 0 : index
    %c0_111 = arith.constant 0 : index
    %209 = vector.load %arg7[%c0_110, %c0_111] : memref<4x1xf32, #tpu.memory_space<vmem>>, vector<4x1xf32>
    %210 = vector.broadcast %209 : vector<4x1xf32> to vector<4x256xf32>
    %211 = arith.addf %208, %210 : vector<4x256xf32>
    %cst_112 = arith.constant dense<0.000000e+00> : vector<4xf32>
    %212 = vector.multi_reduction <add>, %211, %cst_112 [1] : vector<4x256xf32> to vector<4xf32>
    %213 = vector.shape_cast %212 : vector<4xf32> to vector<4x1xf32>
    %cst_113 = arith.constant 3.906250e-03 : f32
    %214 = vector.broadcast %cst_113 : f32 to vector<4x1xf32>
    %215 = arith.mulf %213, %214 : vector<4x1xf32>
    %216 = arith.mulf %211, %211 : vector<4x256xf32>
    %cst_114 = arith.constant dense<0.000000e+00> : vector<4xf32>
    %217 = vector.multi_reduction <add>, %216, %cst_114 [1] : vector<4x256xf32> to vector<4xf32>
    %218 = vector.shape_cast %217 : vector<4xf32> to vector<4x1xf32>
    %cst_115 = arith.constant 3.906250e-03 : f32
    %219 = vector.broadcast %cst_115 : f32 to vector<4x1xf32>
    %220 = arith.mulf %218, %219 : vector<4x1xf32>
    %221 = arith.mulf %215, %215 : vector<4x1xf32>
    %222 = arith.subf %220, %221 : vector<4x1xf32>
    %cst_116 = arith.constant 0.000000e+00 : f32
    %223 = vector.broadcast %cst_116 : f32 to vector<4x1xf32>
    %224 = arith.maximumf %222, %223 : vector<4x1xf32>
    %225 = vector.broadcast %215 : vector<4x1xf32> to vector<4x256xf32>
    %226 = arith.subf %211, %225 : vector<4x256xf32>
    %cst_117 = arith.constant 9.99999974E-6 : f32
    %227 = vector.broadcast %cst_117 : f32 to vector<4x1xf32>
    %228 = arith.addf %224, %227 : vector<4x1xf32>
    %229 = math.rsqrt %228 : vector<4x1xf32>
    %230 = vector.broadcast %229 : vector<4x1xf32> to vector<4x256xf32>
    %231 = arith.mulf %226, %230 : vector<4x256xf32>
    %232 = arith.addf %1, %231 : vector<4x256xf32>
    %c0_118 = arith.constant 0 : index
    %c0_119 = arith.constant 0 : index
    %c0_120 = arith.constant 0 : index
    %233 = vector.load %arg8[%c0_118, %c0_119, %c0_120] : memref<1x4x256xf32, #tpu.memory_space<vmem>>, vector<1x4x256xf32>
    %234 = vector.shape_cast %233 : vector<1x4x256xf32> to vector<4x256xf32>
    %235 = vector.shape_cast %232 : vector<4x256xf32> to vector<1x4x256xf32>
    tpu.vector_store %arg8[%c0_118, %c0_119, %c0_120], %235 {strides = array<i32>} : memref<1x4x256xf32, #tpu.memory_space<vmem>>, vector<1x4x256xf32>,
    return
  }
  func.func @transform_0(%arg0: i32) -> (i32, i32, i32) {
    %c0_i32 = arith.constant 0 : i32
    %c0_i32_0 = arith.constant 0 : i32
    %c0_i32_1 = arith.constant 0 : i32
    return %arg0, %c0_i32, %c0_i32_0 : i32, i32, i32
  }
  func.func @transform_1(%arg0: i32) -> (i32, i32) {
    %c0_i32 = arith.constant 0 : i32
    %c0_i32_0 = arith.constant 0 : i32
    %c0_i32_1 = arith.constant 0 : i32
    return %c0_i32, %c0_i32_0 : i32, i32
  }
  func.func @transform_2(%arg0: i32) -> (i32, i32) {
    %c0_i32 = arith.constant 0 : i32
    %c0_i32_0 = arith.constant 0 : i32
    %c0_i32_1 = arith.constant 0 : i32
    return %c0_i32, %c0_i32_0 : i32, i32
  }
  func.func @transform_3(%arg0: i32) -> (i32, i32, i32) {
    %c0_i32 = arith.constant 0 : i32
    %c0_i32_0 = arith.constant 0 : i32
    %c0_i32_1 = arith.constant 0 : i32
    %c0_i32_2 = arith.constant 0 : i32
    return %c0_i32, %c0_i32_0, %c0_i32_1 : i32, i32, i32
  }
  func.func @transform_4(%arg0: i32) -> (i32, i32) {
    %c0_i32 = arith.constant 0 : i32
    %c0_i32_0 = arith.constant 0 : i32
    %c0_i32_1 = arith.constant 0 : i32
    return %c0_i32, %c0_i32_0 : i32, i32
  }
  func.func @transform_5(%arg0: i32) -> (i32, i32, i32) {
    %c0_i32 = arith.constant 0 : i32
    %c0_i32_0 = arith.constant 0 : i32
    %c0_i32_1 = arith.constant 0 : i32
    %c0_i32_2 = arith.constant 0 : i32
    return %c0_i32, %c0_i32_0, %c0_i32_1 : i32, i32, i32
  }
  func.func @transform_6(%arg0: i32) -> (i32, i32) {
    %c0_i32 = arith.constant 0 : i32
    %c0_i32_0 = arith.constant 0 : i32
    %c0_i32_1 = arith.constant 0 : i32
    return %c0_i32, %c0_i32_0 : i32, i32
  }
  func.func @transform_7(%arg0: i32) -> (i32, i32, i32) {
    %c0_i32 = arith.constant 0 : i32
    %c0_i32_0 = arith.constant 0 : i32
    %c0_i32_1 = arith.constant 0 : i32
    return %arg0, %c0_i32, %c0_i32_0 : i32, i32, i32
  }
}

</mosaic_0001>

<llo_original>
// kernel: tpu_custom_call.1
$region0: #{tpu_custom_call.1}
  #allocation0 [shape = 'u32[]', space=smem, size = 0x4, offset = 0x4, fixed_abs, tag = 'smem constant byte address 0x4 - core index']
  #allocation1 [shape = 'u32[144,128]{1,0:T(1,128)}', space=vmem, size = 0x12000, scoped, tag = 'internal scratch']
  %s0 = inlined_call_operand.vmem [shape: f32[2,4,256], index: 0, kind: input, shape index: {}]
  %s1 = inlined_call_operand.vmem [shape: s32[1,256], index: 1, kind: input, shape index: {}]
  %s2 = inlined_call_operand.vmem [shape: s32[1,256], index: 2, kind: input, shape index: {}]
  %s3 = inlined_call_operand.vmem [shape: bf16[9,4,4], index: 3, kind: input, shape index: {}]
  %s4 = inlined_call_operand.vmem [shape: f32[4,1], index: 4, kind: input, shape index: {}]
  %s5 = inlined_call_operand.vmem [shape: bf16[9,4,4], index: 5, kind: input, shape index: {}]
  %s6 = inlined_call_operand.vmem [shape: f32[4,1], index: 6, kind: input, shape index: {}]
  %s7 = inlined_call_operand.hbm [shape: f32[2,4,256], index: 7, kind: output, shape index: {}]
  %s8 = sld [smem:[#allocation0]]
  $region61: #{tpu_custom_call.1} parent=0
    _
  %s10 = ssub.s32 1, %s8
  %s11 = scalar_select 0, %s10, %s8
  $region1: #{tpu_custom_call.1} parent=0
    #allocation2 [shape = 'u8[8192]{0}', space=vmem, size = 0x2000, scoped, tag = 'output window, operand 0']
    #allocation3 [shape = 's32[2]{0}', space=sflag, size = 0x8, scoped, tag = 'scoped memory for tpu_custom_call.1']
    %12 = vsyncpa [#allocation3], 0
    %s13 = scalar_lea.sflag [#allocation3], 1
    %14 = vsyncpa %s13, 0
    loop: start=0, step=1, limit=4
    $region2: #{tpu_custom_call.1} parent=1 // loop_pre_header
      _
    $region3: #{tpu_custom_call.1} parent=1 // loop_header
      %s16 = sphi 0, %s20
      %p17 = scmp.ge.s32.totalorder %s16, 4
      %s26 = sphi 0, %s28
      %s29 = sphi 0, %s26
      %s30 = sphi 0, %s29
      %s46 = sphi 0, %s30
      %s50 = sphi 0, %s50
      %s52 = sphi 0, %s50
      %s53 = sphi 0, %s52
      %s67 = sphi 0, %s53
      %s71 = sphi 0, %s71
      %s73 = sphi 0, %s71
      %s74 = sphi 0, %s73
      %s88 = sphi 0, %s74
      %s92 = sphi 0, %s92
      %s94 = sphi 0, %s92
      %s95 = sphi 0, %s94
      %s109 = sphi 0, %s95
      %s113 = sphi 0, %s113
      %s115 = sphi 0, %s113
      %s116 = sphi 0, %s115
      %s130 = sphi 0, %s116
      %s134 = sphi 0, %s134
      %s136 = sphi 0, %s134
      %s137 = sphi 0, %s136
      %s151 = sphi 0, %s137
      %s155 = sphi 0, %s155
      %s157 = sphi 0, %s155
      %s158 = sphi 0, %s157
      %s172 = sphi 0, %s158
      %s178 = sphi 0, %s180
      %s181 = sphi 0, %s178
      %s182 = sphi 0, %s181
      %s198 = sphi 0, %s182
    $region4: #{tpu_custom_call.1} parent=1 // loop_header_branch
      %19 = sbr.rel (%p17) target = $region8
    $region5: #{tpu_custom_call.1} parent=1 // loop_body
      %s21 = ssub.s32 %s16, 1
      %s22 = ssub.s32 %s16, 2
      %s23 = sadd.s32 %s16, 1
      %s24 = ssub.s32 %s16, %s23
      %p25 = scmp.eq.s32.totalorder %s24, 0
      %s27 = sadd.s32 %s26, 1
      %s28 = scalar_select %p25, %s26, %s27
      %p31 = pneg %p25
      %p32 = scmp.eq.s32.totalorder %s16, 1
      %p33 = por %p31, %p32
      %p34 = scmp.ne.s32.totalorder %s26, %s29
      %p35 = scmp.eq.s32.totalorder %s16, 0
      %p36 = por %p34, %p35
      %p37 = scmp.ne.s32.totalorder %s26, %s29
      %p38 = scmp.eq.s32.totalorder %s21, 1
      %p39 = por %p37, %p38
      %p40 = scmp.ne.s32.totalorder %s29, %s30
      %p41 = scmp.eq.s32.totalorder %s21, 0
      %p42 = por %p40, %p41
      %p43 = scmp.ne.s32.totalorder %s29, %s30
      %p44 = scmp.eq.s32.totalorder %s22, 1
      %p45 = por %p43, %p44
      %p47 = scmp.ne.s32.totalorder %s30, %s46
      %p48 = scmp.eq.s32.totalorder %s22, 0
      %p49 = por %p47, %p48
      %s51 = sadd.s32 %s50, 1
      %p54 = scmp.eq.s32.totalorder %s16, 1
      %p55 = scmp.ne.s32.totalorder %s50, %s52
      %p56 = scmp.eq.s32.totalorder %s16, 0
      %p57 = por %p55, %p56
      %p58 = scmp.ne.s32.totalorder %s50, %s52
      %p59 = scmp.eq.s32.totalorder %s21, 1
      %p60 = por %p58, %p59
      %p61 = scmp.ne.s32.totalorder %s52, %s53
      %p62 = scmp.eq.s32.totalorder %s21, 0
      %p63 = por %p61, %p62
      %p64 = scmp.ne.s32.totalorder %s52, %s53
      %p65 = scmp.eq.s32.totalorder %s22, 1
      %p66 = por %p64, %p65
      %p68 = scmp.ne.s32.totalorder %s53, %s67
      %p69 = scmp.eq.s32.totalorder %s22, 0
      %p70 = por %p68, %p69
      %s72 = sadd.s32 %s71, 1
      %p75 = scmp.eq.s32.totalorder %s16, 1
      %p76 = scmp.ne.s32.totalorder %s71, %s73
      %p77 = scmp.eq.s32.totalorder %s16, 0
      %p78 = por %p76, %p77
      %p79 = scmp.ne.s32.totalorder %s71, %s73
      %p80 = scmp.eq.s32.totalorder %s21, 1
      %p81 = por %p79, %p80
      %p82 = scmp.ne.s32.totalorder %s73, %s74
      %p83 = scmp.eq.s32.totalorder %s21, 0
      %p84 = por %p82, %p83
      %p85 = scmp.ne.s32.totalorder %s73, %s74
      %p86 = scmp.eq.s32.totalorder %s22, 1
      %p87 = por %p85, %p86
      %p89 = scmp.ne.s32.totalorder %s74, %s88
      %p90 = scmp.eq.s32.totalorder %s22, 0
      %p91 = por %p89, %p90
      %s93 = sadd.s32 %s92, 1
      %p96 = scmp.eq.s32.totalorder %s16, 1
      %p97 = scmp.ne.s32.totalorder %s92, %s94
      %p98 = scmp.eq.s32.totalorder %s16, 0
      %p99 = por %p97, %p98
      %p100 = scmp.ne.s32.totalorder %s92, %s94
      %p101 = scmp.eq.s32.totalorder %s21, 1
      %p102 = por %p100, %p101
      %p103 = scmp.ne.s32.totalorder %s94, %s95
      %p104 = scmp.eq.s32.totalorder %s21, 0
      %p105 = por %p103, %p104
      %p106 = scmp.ne.s32.totalorder %s94, %s95
      %p107 = scmp.eq.s32.totalorder %s22, 1
      %p108 = por %p106, %p107
      %p110 = scmp.ne.s32.totalorder %s95, %s109
      %p111 = scmp.eq.s32.totalorder %s22, 0
      %p112 = por %p110, %p111
      %s114 = sadd.s32 %s113, 1
      %p117 = scmp.eq.s32.totalorder %s16, 1
      %p118 = scmp.ne.s32.totalorder %s113, %s115
      %p119 = scmp.eq.s32.totalorder %s16, 0
      %p120 = por %p118, %p119
      %p121 = scmp.ne.s32.totalorder %s113, %s115
      %p122 = scmp.eq.s32.totalorder %s21, 1
      %p123 = por %p121, %p122
      %p124 = scmp.ne.s32.totalorder %s115, %s116
      %p125 = scmp.eq.s32.totalorder %s21, 0
      %p126 = por %p124, %p125
      %p127 = scmp.ne.s32.totalorder %s115, %s116
      %p128 = scmp.eq.s32.totalorder %s22, 1
      %p129 = por %p127, %p128
      %p131 = scmp.ne.s32.totalorder %s116, %s130
      %p132 = scmp.eq.s32.totalorder %s22, 0
      %p133 = por %p131, %p132
      %s135 = sadd.s32 %s134, 1
      %p138 = scmp.eq.s32.totalorder %s16, 1
      %p139 = scmp.ne.s32.totalorder %s134, %s136
      %p140 = scmp.eq.s32.totalorder %s16, 0
      %p141 = por %p139, %p140
      %p142 = scmp.ne.s32.totalorder %s134, %s136
      %p143 = scmp.eq.s32.totalorder %s21, 1
      %p144 = por %p142, %p143
      %p145 = scmp.ne.s32.totalorder %s136, %s137
      %p146 = scmp.eq.s32.totalorder %s21, 0
      %p147 = por %p145, %p146
      %p148 = scmp.ne.s32.totalorder %s136, %s137
      %p149 = scmp.eq.s32.totalorder %s22, 1
      %p150 = por %p148, %p149
      %p152 = scmp.ne.s32.totalorder %s137, %s151
      %p153 = scmp.eq.s32.totalorder %s22, 0
      %p154 = por %p152, %p153
      %s156 = sadd.s32 %s155, 1
      %p159 = scmp.eq.s32.totalorder %s16, 1
      %p160 = scmp.ne.s32.totalorder %s155, %s157
      %p161 = scmp.eq.s32.totalorder %s16, 0
      %p162 = por %p160, %p161
      %p163 = scmp.ne.s32.totalorder %s155, %s157
      %p164 = scmp.eq.s32.totalorder %s21, 1
      %p165 = por %p163, %p164
      %p166 = scmp.ne.s32.totalorder %s157, %s158
      %p167 = scmp.eq.s32.totalorder %s21, 0
      %p168 = por %p166, %p167
      %p169 = scmp.ne.s32.totalorder %s157, %s158
      %p170 = scmp.eq.s32.totalorder %s22, 1
      %p171 = por %p169, %p170
      %p173 = scmp.ne.s32.totalorder %s158, %s172
      %p174 = scmp.eq.s32.totalorder %s22, 0
      %p175 = por %p173, %p174
      %s176 = ssub.s32 %s16, %s23
      %p177 = scmp.eq.s32.totalorder %s176, 0
      %s179 = sadd.s32 %s178, 1
      %s180 = scalar_select %p177, %s178, %s179
      %p183 = pneg %p177
      %p184 = scmp.eq.s32.totalorder %s16, 1
      %p185 = por %p183, %p184
      %p186 = scmp.ne.s32.totalorder %s178, %s181
      %p187 = scmp.eq.s32.totalorder %s16, 0
      %p188 = por %p186, %p187
      %p189 = scmp.ne.s32.totalorder %s178, %s181
      %p190 = scmp.eq.s32.totalorder %s21, 1
      %p191 = por %p189, %p190
      %p192 = scmp.ne.s32.totalorder %s181, %s182
      %p193 = scmp.eq.s32.totalorder %s21, 0
      %p194 = por %p192, %p193
      %p195 = scmp.ne.s32.totalorder %s181, %s182
      %p196 = scmp.eq.s32.totalorder %s22, 1
      %p197 = por %p195, %p196
      %p199 = scmp.ne.s32.totalorder %s182, %s198
      %p200 = scmp.eq.s32.totalorder %s22, 0
      %p201 = por %p199, %p200
      %p202 = scmp.le.s32.totalorder 1, %s16
      %p203 = scmp.lt.s32.totalorder %s16, 3
      %p204 = pnand %p202, %p203
      %p205 = pneg %p204
      // Predicated region
      $region9: #{tpu_custom_call.1} parent=5 // pred_check
        _
      $region10: #{tpu_custom_call.1} parent=5 // pred_check_branch
        %207 = sbr.rel (%p204) target = $region12
      $region11: #{tpu_custom_call.1} parent=5 // pred_region
        %s208 = ssub.s32 %s16, 1
        // Predicated region
        $region13: #{tpu_custom_call.1} parent=11 // pred_check
          %p209 = pneg %p63
        $region14: #{tpu_custom_call.1} parent=11 // pred_check_branch
          %211 = sbr.rel (%p209) target = $region16
        $region15: #{tpu_custom_call.1} parent=11 // pred_region
          _
        $region16: #{tpu_custom_call.1} parent=11 // pred_fallthru
          _
        // Predicated region
        $region17: #{tpu_custom_call.1} parent=11 // pred_check
          %p212 = pneg %p84
        $region18: #{tpu_custom_call.1} parent=11 // pred_check_branch
          %214 = sbr.rel (%p212) target = $region20
        $region19: #{tpu_custom_call.1} parent=11 // pred_region
          _
        $region20: #{tpu_custom_call.1} parent=11 // pred_fallthru
          _
        // Predicated region
        $region21: #{tpu_custom_call.1} parent=11 // pred_check
          %p215 = pneg %p105
        $region22: #{tpu_custom_call.1} parent=11 // pred_check_branch
          %217 = sbr.rel (%p215) target = $region24
        $region23: #{tpu_custom_call.1} parent=11 // pred_region
          _
        $region24: #{tpu_custom_call.1} parent=11 // pred_fallthru
          _
        // Predicated region
        $region25: #{tpu_custom_call.1} parent=11 // pred_check
          %p218 = pneg %p126
        $region26: #{tpu_custom_call.1} parent=11 // pred_check_branch
          %220 = sbr.rel (%p218) target = $region28
        $region27: #{tpu_custom_call.1} parent=11 // pred_region
          _
        $region28: #{tpu_custom_call.1} parent=11 // pred_fallthru
          _
        // Predicated region
        $region29: #{tpu_custom_call.1} parent=11 // pred_check
          %p221 = pneg %p147
        $region30: #{tpu_custom_call.1} parent=11 // pred_check_branch
          %223 = sbr.rel (%p221) target = $region32
        $region31: #{tpu_custom_call.1} parent=11 // pred_region
          _
        $region32: #{tpu_custom_call.1} parent=11 // pred_fallthru
          _
        // Predicated region
        $region33: #{tpu_custom_call.1} parent=11 // pred_check
          %p224 = pneg %p168
        $region34: #{tpu_custom_call.1} parent=11 // pred_check_branch
          %226 = sbr.rel (%p224) target = $region36
        $region35: #{tpu_custom_call.1} parent=11 // pred_region
          _
        $region36: #{tpu_custom_call.1} parent=11 // pred_fallthru
          _
      $region12: #{tpu_custom_call.1} parent=5 // pred_fallthru
        _
      %p227 = scmp.lt.s32.totalorder %s16, 2
      // Predicated region
      $region37: #{tpu_custom_call.1} parent=5 // pred_check
        %p228 = pneg %p227
      $region38: #{tpu_custom_call.1} parent=5 // pred_check_branch
        %230 = sbr.rel (%p228) target = $region40
      $region39: #{tpu_custom_call.1} parent=5 // pred_region
        // Predicated region
        $region41: #{tpu_custom_call.1} parent=39 // pred_check
          %p231 = pneg %p36
        $region42: #{tpu_custom_call.1} parent=39 // pred_check_branch
          %233 = sbr.rel (%p231) target = $region44
        $region43: #{tpu_custom_call.1} parent=39 // pred_region
          %p234 = scmp.lt.s32.totalorder %s16, 1
          %s235 = scalar_select %p234, %s16, 1
          %s236 = smul.addr %s235, 2
          %s237 = smul.addr %s236, 4
          %s238 = scalar_lea.vmem %s0, %s237
        $region44: #{tpu_custom_call.1} parent=39 // pred_fallthru
          _
      $region40: #{tpu_custom_call.1} parent=5 // pred_fallthru
        _
      %p239 = scmp.le.s32.totalorder 1, %s16
      %p240 = scmp.lt.s32.totalorder %s16, 3
      %p241 = pnand %p239, %p240
      %p242 = pneg %p241
      // Predicated region
      $region45: #{tpu_custom_call.1} parent=5 // pred_check
        _
      $region46: #{tpu_custom_call.1} parent=5 // pred_check_branch
        %244 = sbr.rel (%p241) target = $region48
      $region47: #{tpu_custom_call.1} parent=5 // pred_region
        %s245 = ssub.s32 %s16, 1
        %p246 = scmp.lt.s32.totalorder %s21, 1
        %s247 = scalar_select %p246, %s21, 1
        %s248 = smul.addr %s247, 2
        %s249 = smul.addr %s248, 4
        %s250 = scalar_lea.vmem %s0, %s249
        %p251 = pneg %p42
        %p252 = pneg %p39
        %p253 = pneg %p63
        %p254 = pneg %p60
        %p255 = pneg %p84
        %p256 = pneg %p81
        %p257 = pneg %p105
        %p258 = pneg %p102
        %p259 = pneg %p126
        %p260 = pneg %p123
        %p261 = pneg %p147
        %p262 = pneg %p144
        %p263 = pneg %p168
        %p264 = pneg %p165
        %p265 = pneg %p194
        %p266 = pneg %p191
        %s267 = sand.u32 %s181, 1
        %s268 = scalar_lea.sflag [#allocation3], %s267
        %s269 = sand.u32 %s181, 1
        %s270 = smul.addr %s269, 8
        %s271 = scalar_lea.vmem [#allocation2], %s270
        %p272 = scmp.lt.s32.totalorder %s21, 1
        %s273 = scalar_select %p272, %s21, 1
        %s274 = smul.addr %s273, 2
        %s275 = smul.addr %s274, 4
        %s276 = scalar_lea.vmem %s0, %s275
        %v278 = vld [vmem:[%s276] sm:$0xff]
        %v279 = vld [vmem:[%s1] sm:$0x3]
        %v280 = vld [vmem:[%s2] sm:$0x3]
        %vm281 = vcmp.eq.s32.totalorder %v279, 0
        %vm282 = vcmp.eq.s32.totalorder %v279, 15
        %vm283 = vcmp.eq.s32.totalorder %v280, 0
        %vm284 = vcmp.eq.s32.totalorder %v280, 15
        %v286 = vcombine.high %v278, %v278
        %288 = vrot.lane.b32.xlu0 %v278, 1
        %v289 = vpop.permute.xlu0 %288
        %290 = vrot.lane.b32.xlu0 %v286, 1
        %v291 = vpop.permute.xlu0 %290
        %v292 = vlaneseq
        %v293 = vand.u32 %v292, 127
        %vm294 = vcmp.lt.s32.totalorder %v293, 1
        %v295 = vsel %vm294, %v289, %v291
        %v296 = vsel %vm294, %v291, %v289
        %297 = vrot.lane.b32.xlu0 %v278, 127
        %v298 = vpop.permute.xlu0 %297
        %299 = vrot.lane.b32.xlu0 %v286, 127
        %v300 = vpop.permute.xlu0 %299
        %vm301 = vcmp.lt.s32.totalorder %v293, 127
        %v302 = vsel %vm301, %v298, %v300
        %v303 = vsel %vm301, %v300, %v298
        %v304 = vsel %vm281, 1, 0
        %v305 = vlaneseq
        %v306 = vshrl.u32 %v305, 7
        %v307 = vsub.s32 0, %v306
        %v308 = vrot.slane %v304, %v307
        %v309 = vlaneseq
        %v310 = vshrl.u32 %v309, 7
        %v311 = vsub.s32 1, %v310
        %v312 = vrot.slane %v304, %v311
        %vm313 = vcmp.eq.s32.totalorder %v308, 1
        %vm314 = vcmp.eq.s32.totalorder %v312, 1
        %v315 = vsel %vm313, %v302, %v296
        %v316 = vsel %vm314, %v303, %v295
        %317 = vrot.lane.b32.xlu0 %v315, 16
        %v318 = vpop.permute.xlu0 %317
        %319 = vrot.lane.b32.xlu0 %v316, 16
        %v320 = vpop.permute.xlu0 %319
        %vm321 = vcmp.lt.s32.totalorder %v293, 16
        %v322 = vsel %vm321, %v318, %v320
        %v323 = vsel %vm321, %v320, %v318
        %324 = vrot.lane.b32.xlu0 %v315, 112
        %v325 = vpop.permute.xlu0 %324
        %326 = vrot.lane.b32.xlu0 %v316, 112
        %v327 = vpop.permute.xlu0 %326
        %vm328 = vcmp.lt.s32.totalorder %v293, 112
        %v329 = vsel %vm328, %v325, %v327
        %v330 = vsel %vm328, %v327, %v325
        %v331 = vsel %vm283, 1, 0
        %v332 = vlaneseq
        %v333 = vshrl.u32 %v332, 7
        %v334 = vsub.s32 0, %v333
        %v335 = vrot.slane %v331, %v334
        %v336 = vlaneseq
        %v337 = vshrl.u32 %v336, 7
        %v338 = vsub.s32 1, %v337
        %v339 = vrot.slane %v331, %v338
        %vm340 = vcmp.eq.s32.totalorder %v335, 1
        %vm341 = vcmp.eq.s32.totalorder %v339, 1
        %v342 = vsel %vm340, %v329, %v323
        %v343 = vsel %vm341, %v330, %v322
        %v344 = vpack.c.bf16 %v342, %v342
        %v345 = vpack.c.bf16 %v343, %v343
        %v346 = vld [vmem:[%s3] sm:$0x3]
        %v347 = vpack.c.bf16 %v315, %v315
        %v348 = vpack.c.bf16 %v316, %v316
        %s349 = scalar_lea.vmem %s3, 6
        %v350 = vld [vmem:[%s349] sm:$0x3]
        %vm351 = vcmask 31744
        %v353 = vsel %vm351, %v350, 0
        %vm355 = vcmask 1041408
        %v357 = vsel %vm355, %v347, 0
        %v360 = vsel %vm355, %v348, 0
        %362 = vmatprep.subr.bf16.mxu0 0
        %363 = vmatpush1.bf16.msra.mxu0 0
        %364 = vmatprep.subr.bf16.mxu0 0
        %365 = vmatpush1.bf16.msra.mxu0 0
        %366 = vmatprep.subr.bf16.mxu0 0
        %367 = vmatpush1.bf16.msra.mxu0 0
        %368 = vmatprep.subr.bf16.mxu0 0
        %369 = vmatpush1.bf16.msra.mxu0 0
        %370 = vmatprep.subr.bf16.mxu0 0
        %371 = vmatpush1.bf16.msra.mxu0 0
        %372 = vmatprep.subr.bf16.mxu0 0
        %373 = vmatpush1.bf16.msra.mxu0 0
        %374 = vmatprep.subr.bf16.mxu0 0
        %375 = vmatpush1.bf16.msra.mxu0 0
        %376 = vmatprep.subr.bf16.mxu0 %v360
        %377 = vmatpush1.bf16.msra.mxu0 %v357
        %378 = vmatprep.subr.bf16.mxu0 0
        %379 = vmatpush2.bf16.msra.mxu0 0
        %380 = vmatprep.subr.bf16.mxu0 0
        %381 = vmatpush2.bf16.msra.mxu0 0
        %382 = vmatprep.subr.bf16.mxu0 0
        %383 = vmatpush2.bf16.msra.mxu0 0
        %384 = vmatprep.subr.bf16.mxu0 0
        %385 = vmatpush2.bf16.msra.mxu0 0
        %386 = vmatprep.subr.bf16.mxu0 0
        %387 = vmatpush2.bf16.msra.mxu0 0
        %388 = vmatprep.subr.bf16.mxu0 0
        %389 = vmatpush2.bf16.msra.mxu0 0
        %390 = vmatprep.subr.bf16.mxu0 0
        %391 = vmatpush2.bf16.msra.mxu0 0
        %392 = vmatprep.subr.bf16.mxu0 0
        %393 = vmatpush2.bf16.msra.mxu0 0
        %394 = vmatprep.mubr.bf16.mxu0 0
        %395 = vmatmul.mubr.bf16.gmra.mxu0 %v353
        %v396 = vpop.f32.mrf.mxu0
        %v397 = vadd.f32 0.0, %v396
        %v398 = vpop.f32.mrf.mxu0
        %v399 = vadd.f32 0.0, %v398
        %v400 = vpop.f32.mrf.mxu0
        %v401 = vpop.f32.mrf.mxu0
        %402 = vdwg.mxu0
        %v404 = vsel %vm351, %v346, 0
        %v407 = vsel %vm355, %v344, 0
        %v410 = vsel %vm355, %v345, 0
        %412 = vmatprep.subr.bf16.mxu0 0
        %413 = vmatpush1.bf16.msra.mxu0 0
        %414 = vmatprep.subr.bf16.mxu0 0
        %415 = vmatpush1.bf16.msra.mxu0 0
        %416 = vmatprep.subr.bf16.mxu0 0
        %417 = vmatpush1.bf16.msra.mxu0 0
        %418 = vmatprep.subr.bf16.mxu0 0
        %419 = vmatpush1.bf16.msra.mxu0 0
        %420 = vmatprep.subr.bf16.mxu0 0
        %421 = vmatpush1.bf16.msra.mxu0 0
        %422 = vmatprep.subr.bf16.mxu0 0
        %423 = vmatpush1.bf16.msra.mxu0 0
        %424 = vmatprep.subr.bf16.mxu0 0
        %425 = vmatpush1.bf16.msra.mxu0 0
        %426 = vmatprep.subr.bf16.mxu0 %v410
        %427 = vmatpush1.bf16.msra.mxu0 %v407
        %428 = vmatprep.subr.bf16.mxu0 0
        %429 = vmatpush2.bf16.msra.mxu0 0
        %430 = vmatprep.subr.bf16.mxu0 0
        %431 = vmatpush2.bf16.msra.mxu0 0
        %432 = vmatprep.subr.bf16.mxu0 0
        %433 = vmatpush2.bf16.msra.mxu0 0
        %434 = vmatprep.subr.bf16.mxu0 0
        %435 = vmatpush2.bf16.msra.mxu0 0
        %436 = vmatprep.subr.bf16.mxu0 0
        %437 = vmatpush2.bf16.msra.mxu0 0
        %438 = vmatprep.subr.bf16.mxu0 0
        %439 = vmatpush2.bf16.msra.mxu0 0
        %440 = vmatprep.subr.bf16.mxu0 0
        %441 = vmatpush2.bf16.msra.mxu0 0
        %442 = vmatprep.subr.bf16.mxu0 0
        %443 = vmatpush2.bf16.msra.mxu0 0
        %444 = vmatprep.mubr.bf16.mxu0 0
        %445 = vmatmul.mubr.bf16.gmra.mxu0 %v404
        %v446 = vpop.f32.mrf.mxu0
        %v447 = vadd.f32 %v397, %v446
        %v448 = vpop.f32.mrf.mxu0
        %v449 = vadd.f32 %v399, %v448
        %v450 = vpop.f32.mrf.mxu0
        %v451 = vpop.f32.mrf.mxu0
        %452 = vdwg.mxu0
        %v453 = vsel %vm284, 1, 0
        %v454 = vlaneseq
        %v455 = vshrl.u32 %v454, 7
        %v456 = vsub.s32 0, %v455
        %v457 = vrot.slane %v453, %v456
        %v458 = vlaneseq
        %v459 = vshrl.u32 %v458, 7
        %v460 = vsub.s32 1, %v459
        %v461 = vrot.slane %v453, %v460
        %vm462 = vcmp.eq.s32.totalorder %v457, 1
        %vm463 = vcmp.eq.s32.totalorder %v461, 1
        %v464 = vsel %vm462, %v323, %v329
        %v465 = vsel %vm463, %v322, %v330
        %v466 = vpack.c.bf16 %v464, %v464
        %v467 = vpack.c.bf16 %v465, %v465
        %s468 = scalar_lea.vmem %s3, 12
        %v469 = vld [vmem:[%s468] sm:$0x3]
        %v471 = vsel %vm351, %v469, 0
        %v474 = vsel %vm355, %v466, 0
        %v477 = vsel %vm355, %v467, 0
        %479 = vmatprep.subr.bf16.mxu0 0
        %480 = vmatpush1.bf16.msra.mxu0 0
        %481 = vmatprep.subr.bf16.mxu0 0
        %482 = vmatpush1.bf16.msra.mxu0 0
        %483 = vmatprep.subr.bf16.mxu0 0
        %484 = vmatpush1.bf16.msra.mxu0 0
        %485 = vmatprep.subr.bf16.mxu0 0
        %486 = vmatpush1.bf16.msra.mxu0 0
        %487 = vmatprep.subr.bf16.mxu0 0
        %488 = vmatpush1.bf16.msra.mxu0 0
        %489 = vmatprep.subr.bf16.mxu0 0
        %490 = vmatpush1.bf16.msra.mxu0 0
        %491 = vmatprep.subr.bf16.mxu0 0
        %492 = vmatpush1.bf16.msra.mxu0 0
        %493 = vmatprep.subr.bf16.mxu0 %v477
        %494 = vmatpush1.bf16.msra.mxu0 %v474
        %495 = vmatprep.subr.bf16.mxu0 0
        %496 = vmatpush2.bf16.msra.mxu0 0
        %497 = vmatprep.subr.bf16.mxu0 0
        %498 = vmatpush2.bf16.msra.mxu0 0
        %499 = vmatprep.subr.bf16.mxu0 0
        %500 = vmatpush2.bf16.msra.mxu0 0
        %501 = vmatprep.subr.bf16.mxu0 0
        %502 = vmatpush2.bf16.msra.mxu0 0
        %503 = vmatprep.subr.bf16.mxu0 0
        %504 = vmatpush2.bf16.msra.mxu0 0
        %505 = vmatprep.subr.bf16.mxu0 0
        %506 = vmatpush2.bf16.msra.mxu0 0
        %507 = vmatprep.subr.bf16.mxu0 0
        %508 = vmatpush2.bf16.msra.mxu0 0
        %509 = vmatprep.subr.bf16.mxu0 0
        %510 = vmatpush2.bf16.msra.mxu0 0
        %511 = vmatprep.mubr.bf16.mxu0 0
        %512 = vmatmul.mubr.bf16.gmra.mxu0 %v471
        %v513 = vpop.f32.mrf.mxu0
        %v514 = vadd.f32 0.0, %v513
        %v515 = vpop.f32.mrf.mxu0
        %v516 = vadd.f32 0.0, %v515
        %v517 = vpop.f32.mrf.mxu0
        %v518 = vpop.f32.mrf.mxu0
        %519 = vdwg.mxu0
        %v520 = vadd.f32 %v447, %v514
        %v521 = vadd.f32 %v449, %v516
        %522 = vrot.lane.b32.xlu0 %v278, 16
        %v523 = vpop.permute.xlu0 %522
        %524 = vrot.lane.b32.xlu0 %v286, 16
        %v525 = vpop.permute.xlu0 %524
        %v526 = vsel %vm321, %v523, %v525
        %v527 = vsel %vm321, %v525, %v523
        %528 = vrot.lane.b32.xlu0 %v278, 112
        %v529 = vpop.permute.xlu0 %528
        %530 = vrot.lane.b32.xlu0 %v286, 112
        %v531 = vpop.permute.xlu0 %530
        %v532 = vsel %vm328, %v529, %v531
        %v533 = vsel %vm328, %v531, %v529
        %v534 = vsel %vm340, %v532, %v527
        %v535 = vsel %vm341, %v533, %v526
        %v536 = vpack.c.bf16 %v534, %v534
        %v537 = vpack.c.bf16 %v535, %v535
        %s538 = scalar_lea.vmem %s3, 2
        %v539 = vld [vmem:[%s538] sm:$0x3]
        %v541 = vsel %vm351, %v539, 0
        %v544 = vsel %vm355, %v536, 0
        %v547 = vsel %vm355, %v537, 0
        %549 = vmatprep.subr.bf16.mxu0 0
        %550 = vmatpush1.bf16.msra.mxu0 0
        %551 = vmatprep.subr.bf16.mxu0 0
        %552 = vmatpush1.bf16.msra.mxu0 0
        %553 = vmatprep.subr.bf16.mxu0 0
        %554 = vmatpush1.bf16.msra.mxu0 0
        %555 = vmatprep.subr.bf16.mxu0 0
        %556 = vmatpush1.bf16.msra.mxu0 0
        %557 = vmatprep.subr.bf16.mxu0 0
        %558 = vmatpush1.bf16.msra.mxu0 0
        %559 = vmatprep.subr.bf16.mxu0 0
        %560 = vmatpush1.bf16.msra.mxu0 0
        %561 = vmatprep.subr.bf16.mxu0 0
        %562 = vmatpush1.bf16.msra.mxu0 0
        %563 = vmatprep.subr.bf16.mxu0 %v547
        %564 = vmatpush1.bf16.msra.mxu0 %v544
        %565 = vmatprep.subr.bf16.mxu0 0
        %566 = vmatpush2.bf16.msra.mxu0 0
        %567 = vmatprep.subr.bf16.mxu0 0
        %568 = vmatpush2.bf16.msra.mxu0 0
        %569 = vmatprep.subr.bf16.mxu0 0
        %570 = vmatpush2.bf16.msra.mxu0 0
        %571 = vmatprep.subr.bf16.mxu0 0
        %572 = vmatpush2.bf16.msra.mxu0 0
        %573 = vmatprep.subr.bf16.mxu0 0
        %574 = vmatpush2.bf16.msra.mxu0 0
        %575 = vmatprep.subr.bf16.mxu0 0
        %576 = vmatpush2.bf16.msra.mxu0 0
        %577 = vmatprep.subr.bf16.mxu0 0
        %578 = vmatpush2.bf16.msra.mxu0 0
        %579 = vmatprep.subr.bf16.mxu0 0
        %580 = vmatpush2.bf16.msra.mxu0 0
        %581 = vmatprep.mubr.bf16.mxu0 0
        %582 = vmatmul.mubr.bf16.gmra.mxu0 %v541
        %v583 = vpop.f32.mrf.mxu0
        %v584 = vadd.f32 0.0, %v583
        %v585 = vpop.f32.mrf.mxu0
        %v586 = vadd.f32 0.0, %v585
        %v587 = vpop.f32.mrf.mxu0
        %v588 = vpop.f32.mrf.mxu0
        %589 = vdwg.mxu0
        %v590 = vadd.f32 %v520, %v584
        %v591 = vadd.f32 %v521, %v586
        %v592 = vpack.c.bf16 %v278, %v278
        %v593 = vpack.c.bf16 %v286, %v286
        %s594 = scalar_lea.vmem %s3, 8
        %v595 = vld [vmem:[%s594] sm:$0x3]
        %v597 = vsel %vm351, %v595, 0
        %v600 = vsel %vm355, %v592, 0
        %v603 = vsel %vm355, %v593, 0
        %605 = vmatprep.subr.bf16.mxu0 0
        %606 = vmatpush1.bf16.msra.mxu0 0
        %607 = vmatprep.subr.bf16.mxu0 0
        %608 = vmatpush1.bf16.msra.mxu0 0
        %609 = vmatprep.subr.bf16.mxu0 0
        %610 = vmatpush1.bf16.msra.mxu0 0
        %611 = vmatprep.subr.bf16.mxu0 0
        %612 = vmatpush1.bf16.msra.mxu0 0
        %613 = vmatprep.subr.bf16.mxu0 0
        %614 = vmatpush1.bf16.msra.mxu0 0
        %615 = vmatprep.subr.bf16.mxu0 0
        %616 = vmatpush1.bf16.msra.mxu0 0
        %617 = vmatprep.subr.bf16.mxu0 0
        %618 = vmatpush1.bf16.msra.mxu0 0
        %619 = vmatprep.subr.bf16.mxu0 %v603
        %620 = vmatpush1.bf16.msra.mxu0 %v600
        %621 = vmatprep.subr.bf16.mxu0 0
        %622 = vmatpush2.bf16.msra.mxu0 0
        %623 = vmatprep.subr.bf16.mxu0 0
        %624 = vmatpush2.bf16.msra.mxu0 0
        %625 = vmatprep.subr.bf16.mxu0 0
        %626 = vmatpush2.bf16.msra.mxu0 0
        %627 = vmatprep.subr.bf16.mxu0 0
        %628 = vmatpush2.bf16.msra.mxu0 0
        %629 = vmatprep.subr.bf16.mxu0 0
        %630 = vmatpush2.bf16.msra.mxu0 0
        %631 = vmatprep.subr.bf16.mxu0 0
        %632 = vmatpush2.bf16.msra.mxu0 0
        %633 = vmatprep.subr.bf16.mxu0 0
        %634 = vmatpush2.bf16.msra.mxu0 0
        %635 = vmatprep.subr.bf16.mxu0 0
        %636 = vmatpush2.bf16.msra.mxu0 0
        %637 = vmatprep.mubr.bf16.mxu0 0
        %638 = vmatmul.mubr.bf16.gmra.mxu0 %v597
        %v639 = vpop.f32.mrf.mxu0
        %v640 = vadd.f32 0.0, %v639
        %v641 = vpop.f32.mrf.mxu0
        %v642 = vadd.f32 0.0, %v641
        %v643 = vpop.f32.mrf.mxu0
        %v644 = vpop.f32.mrf.mxu0
        %645 = vdwg.mxu0
        %v646 = vadd.f32 %v590, %v640
        %v647 = vadd.f32 %v591, %v642
        %v648 = vsel %vm462, %v527, %v532
        %v649 = vsel %vm463, %v526, %v533
        %v650 = vpack.c.bf16 %v648, %v648
        %v651 = vpack.c.bf16 %v649, %v649
        %s652 = scalar_lea.vmem %s3, 14
        %v653 = vld [vmem:[%s652] sm:$0x3]
        %v655 = vsel %vm351, %v653, 0
        %v658 = vsel %vm355, %v650, 0
        %v661 = vsel %vm355, %v651, 0
        %663 = vmatprep.subr.bf16.mxu0 0
        %664 = vmatpush1.bf16.msra.mxu0 0
        %665 = vmatprep.subr.bf16.mxu0 0
        %666 = vmatpush1.bf16.msra.mxu0 0
        %667 = vmatprep.subr.bf16.mxu0 0
        %668 = vmatpush1.bf16.msra.mxu0 0
        %669 = vmatprep.subr.bf16.mxu0 0
        %670 = vmatpush1.bf16.msra.mxu0 0
        %671 = vmatprep.subr.bf16.mxu0 0
        %672 = vmatpush1.bf16.msra.mxu0 0
        %673 = vmatprep.subr.bf16.mxu0 0
        %674 = vmatpush1.bf16.msra.mxu0 0
        %675 = vmatprep.subr.bf16.mxu0 0
        %676 = vmatpush1.bf16.msra.mxu0 0
        %677 = vmatprep.subr.bf16.mxu0 %v661
        %678 = vmatpush1.bf16.msra.mxu0 %v658
        %679 = vmatprep.subr.bf16.mxu0 0
        %680 = vmatpush2.bf16.msra.mxu0 0
        %681 = vmatprep.subr.bf16.mxu0 0
        %682 = vmatpush2.bf16.msra.mxu0 0
        %683 = vmatprep.subr.bf16.mxu0 0
        %684 = vmatpush2.bf16.msra.mxu0 0
        %685 = vmatprep.subr.bf16.mxu0 0
        %686 = vmatpush2.bf16.msra.mxu0 0
        %687 = vmatprep.subr.bf16.mxu0 0
        %688 = vmatpush2.bf16.msra.mxu0 0
        %689 = vmatprep.subr.bf16.mxu0 0
        %690 = vmatpush2.bf16.msra.mxu0 0
        %691 = vmatprep.subr.bf16.mxu0 0
        %692 = vmatpush2.bf16.msra.mxu0 0
        %693 = vmatprep.subr.bf16.mxu0 0
        %694 = vmatpush2.bf16.msra.mxu0 0
        %695 = vmatprep.mubr.bf16.mxu0 0
        %696 = vmatmul.mubr.bf16.gmra.mxu0 %v655
        %v697 = vpop.f32.mrf.mxu0
        %v698 = vadd.f32 0.0, %v697
        %v699 = vpop.f32.mrf.mxu0
        %v700 = vadd.f32 0.0, %v699
        %v701 = vpop.f32.mrf.mxu0
        %v702 = vpop.f32.mrf.mxu0
        %703 = vdwg.mxu0
        %v704 = vadd.f32 %v646, %v698
        %v705 = vadd.f32 %v647, %v700
        %v706 = vsel %vm282, 1, 0
        %v707 = vlaneseq
        %v708 = vshrl.u32 %v707, 7
        %v709 = vsub.s32 0, %v708
        %v710 = vrot.slane %v706, %v709
        %v711 = vlaneseq
        %v712 = vshrl.u32 %v711, 7
        %v713 = vsub.s32 1, %v712
        %v714 = vrot.slane %v706, %v713
        %vm715 = vcmp.eq.s32.totalorder %v710, 1
        %vm716 = vcmp.eq.s32.totalorder %v714, 1
        %v717 = vsel %vm715, %v296, %v302
        %v718 = vsel %vm716, %v295, %v303
        %719 = vrot.lane.b32.xlu0 %v717, 16
        %v720 = vpop.permute.xlu0 %719
        %721 = vrot.lane.b32.xlu0 %v718, 16
        %v722 = vpop.permute.xlu0 %721
        %v723 = vsel %vm321, %v720, %v722
        %v724 = vsel %vm321, %v722, %v720
        %725 = vrot.lane.b32.xlu0 %v717, 112
        %v726 = vpop.permute.xlu0 %725
        %727 = vrot.lane.b32.xlu0 %v718, 112
        %v728 = vpop.permute.xlu0 %727
        %v729 = vsel %vm328, %v726, %v728
        %v730 = vsel %vm328, %v728, %v726
        %v731 = vsel %vm340, %v729, %v724
        %v732 = vsel %vm341, %v730, %v723
        %v733 = vpack.c.bf16 %v731, %v731
        %v734 = vpack.c.bf16 %v732, %v732
        %s735 = scalar_lea.vmem %s3, 4
        %v736 = vld [vmem:[%s735] sm:$0x3]
        %v738 = vsel %vm351, %v736, 0
        %v741 = vsel %vm355, %v733, 0
        %v744 = vsel %vm355, %v734, 0
        %746 = vmatprep.subr.bf16.mxu0 0
        %747 = vmatpush1.bf16.msra.mxu0 0
        %748 = vmatprep.subr.bf16.mxu0 0
        %749 = vmatpush1.bf16.msra.mxu0 0
        %750 = vmatprep.subr.bf16.mxu0 0
        %751 = vmatpush1.bf16.msra.mxu0 0
        %752 = vmatprep.subr.bf16.mxu0 0
        %753 = vmatpush1.bf16.msra.mxu0 0
        %754 = vmatprep.subr.bf16.mxu0 0
        %755 = vmatpush1.bf16.msra.mxu0 0
        %756 = vmatprep.subr.bf16.mxu0 0
        %757 = vmatpush1.bf16.msra.mxu0 0
        %758 = vmatprep.subr.bf16.mxu0 0
        %759 = vmatpush1.bf16.msra.mxu0 0
        %760 = vmatprep.subr.bf16.mxu0 %v744
        %761 = vmatpush1.bf16.msra.mxu0 %v741
        %762 = vmatprep.subr.bf16.mxu0 0
        %763 = vmatpush2.bf16.msra.mxu0 0
        %764 = vmatprep.subr.bf16.mxu0 0
        %765 = vmatpush2.bf16.msra.mxu0 0
        %766 = vmatprep.subr.bf16.mxu0 0
        %767 = vmatpush2.bf16.msra.mxu0 0
        %768 = vmatprep.subr.bf16.mxu0 0
        %769 = vmatpush2.bf16.msra.mxu0 0
        %770 = vmatprep.subr.bf16.mxu0 0
        %771 = vmatpush2.bf16.msra.mxu0 0
        %772 = vmatprep.subr.bf16.mxu0 0
        %773 = vmatpush2.bf16.msra.mxu0 0
        %774 = vmatprep.subr.bf16.mxu0 0
        %775 = vmatpush2.bf16.msra.mxu0 0
        %776 = vmatprep.subr.bf16.mxu0 0
        %777 = vmatpush2.bf16.msra.mxu0 0
        %778 = vmatprep.mubr.bf16.mxu0 0
        %779 = vmatmul.mubr.bf16.gmra.mxu0 %v738
        %v780 = vpop.f32.mrf.mxu0
        %v781 = vadd.f32 0.0, %v780
        %v782 = vpop.f32.mrf.mxu0
        %v783 = vadd.f32 0.0, %v782
        %v784 = vpop.f32.mrf.mxu0
        %v785 = vpop.f32.mrf.mxu0
        %786 = vdwg.mxu0
        %v787 = vadd.f32 %v704, %v781
        %v788 = vadd.f32 %v705, %v783
        %v789 = vpack.c.bf16 %v717, %v717
        %v790 = vpack.c.bf16 %v718, %v718
        %s791 = scalar_lea.vmem %s3, 10
        %v792 = vld [vmem:[%s791] sm:$0x3]
        %v794 = vsel %vm351, %v792, 0
        %v797 = vsel %vm355, %v789, 0
        %v800 = vsel %vm355, %v790, 0
        %802 = vmatprep.subr.bf16.mxu0 0
        %803 = vmatpush1.bf16.msra.mxu0 0
        %804 = vmatprep.subr.bf16.mxu0 0
        %805 = vmatpush1.bf16.msra.mxu0 0
        %806 = vmatprep.subr.bf16.mxu0 0
        %807 = vmatpush1.bf16.msra.mxu0 0
        %808 = vmatprep.subr.bf16.mxu0 0
        %809 = vmatpush1.bf16.msra.mxu0 0
        %810 = vmatprep.subr.bf16.mxu0 0
        %811 = vmatpush1.bf16.msra.mxu0 0
        %812 = vmatprep.subr.bf16.mxu0 0
        %813 = vmatpush1.bf16.msra.mxu0 0
        %814 = vmatprep.subr.bf16.mxu0 0
        %815 = vmatpush1.bf16.msra.mxu0 0
        %816 = vmatprep.subr.bf16.mxu0 %v800
        %817 = vmatpush1.bf16.msra.mxu0 %v797
        %818 = vmatprep.subr.bf16.mxu0 0
        %819 = vmatpush2.bf16.msra.mxu0 0
        %820 = vmatprep.subr.bf16.mxu0 0
        %821 = vmatpush2.bf16.msra.mxu0 0
        %822 = vmatprep.subr.bf16.mxu0 0
        %823 = vmatpush2.bf16.msra.mxu0 0
        %824 = vmatprep.subr.bf16.mxu0 0
        %825 = vmatpush2.bf16.msra.mxu0 0
        %826 = vmatprep.subr.bf16.mxu0 0
        %827 = vmatpush2.bf16.msra.mxu0 0
        %828 = vmatprep.subr.bf16.mxu0 0
        %829 = vmatpush2.bf16.msra.mxu0 0
        %830 = vmatprep.subr.bf16.mxu0 0
        %831 = vmatpush2.bf16.msra.mxu0 0
        %832 = vmatprep.subr.bf16.mxu0 0
        %833 = vmatpush2.bf16.msra.mxu0 0
        %834 = vmatprep.mubr.bf16.mxu0 0
        %835 = vmatmul.mubr.bf16.gmra.mxu0 %v794
        %v836 = vpop.f32.mrf.mxu0
        %v837 = vadd.f32 0.0, %v836
        %v838 = vpop.f32.mrf.mxu0
        %v839 = vadd.f32 0.0, %v838
        %v840 = vpop.f32.mrf.mxu0
        %v841 = vpop.f32.mrf.mxu0
        %842 = vdwg.mxu0
        %v843 = vadd.f32 %v787, %v837
        %v844 = vadd.f32 %v788, %v839
        %v845 = vsel %vm462, %v724, %v729
        %v846 = vsel %vm463, %v723, %v730
        %v847 = vpack.c.bf16 %v845, %v845
        %v848 = vpack.c.bf16 %v846, %v846
        %s849 = scalar_lea.vmem %s3, 16
        %v850 = vld [vmem:[%s849] sm:$0x3]
        %v852 = vsel %vm351, %v850, 0
        %v855 = vsel %vm355, %v847, 0
        %v858 = vsel %vm355, %v848, 0
        %860 = vmatprep.subr.bf16.mxu0 0
        %861 = vmatpush1.bf16.msra.mxu0 0
        %862 = vmatprep.subr.bf16.mxu0 0
        %863 = vmatpush1.bf16.msra.mxu0 0
        %864 = vmatprep.subr.bf16.mxu0 0
        %865 = vmatpush1.bf16.msra.mxu0 0
        %866 = vmatprep.subr.bf16.mxu0 0
        %867 = vmatpush1.bf16.msra.mxu0 0
        %868 = vmatprep.subr.bf16.mxu0 0
        %869 = vmatpush1.bf16.msra.mxu0 0
        %870 = vmatprep.subr.bf16.mxu0 0
        %871 = vmatpush1.bf16.msra.mxu0 0
        %872 = vmatprep.subr.bf16.mxu0 0
        %873 = vmatpush1.bf16.msra.mxu0 0
        %874 = vmatprep.subr.bf16.mxu0 %v858
        %875 = vmatpush1.bf16.msra.mxu0 %v855
        %876 = vmatprep.subr.bf16.mxu0 0
        %877 = vmatpush2.bf16.msra.mxu0 0
        %878 = vmatprep.subr.bf16.mxu0 0
        %879 = vmatpush2.bf16.msra.mxu0 0
        %880 = vmatprep.subr.bf16.mxu0 0
        %881 = vmatpush2.bf16.msra.mxu0 0
        %882 = vmatprep.subr.bf16.mxu0 0
        %883 = vmatpush2.bf16.msra.mxu0 0
        %884 = vmatprep.subr.bf16.mxu0 0
        %885 = vmatpush2.bf16.msra.mxu0 0
        %886 = vmatprep.subr.bf16.mxu0 0
        %887 = vmatpush2.bf16.msra.mxu0 0
        %888 = vmatprep.subr.bf16.mxu0 0
        %889 = vmatpush2.bf16.msra.mxu0 0
        %890 = vmatprep.subr.bf16.mxu0 0
        %891 = vmatpush2.bf16.msra.mxu0 0
        %892 = vmatprep.mubr.bf16.mxu0 0
        %893 = vmatmul.mubr.bf16.gmra.mxu0 %v852
        %v894 = vpop.f32.mrf.mxu0
        %v895 = vadd.f32 0.0, %v894
        %v896 = vpop.f32.mrf.mxu0
        %v897 = vadd.f32 0.0, %v896
        %v898 = vpop.f32.mrf.mxu0
        %v899 = vpop.f32.mrf.mxu0
        %900 = vdwg.mxu0
        %v901 = vadd.f32 %v843, %v895
        %v902 = vadd.f32 %v844, %v897
        %v903 = vld [vmem:[%s4] sm:$0xf]
        %905 = vset.pattern.permute.xlu0 0
        %906 = vperm.xlu0 %905, %v903
        %v907 = vpop.permute.xlu0 %906
        %v909 = vadd.f32 %v901, %v907
        %v910 = vadd.f32 %v902, %v907
        %vm911 = vcmask 1043456
        %v912 = vsel %vm911, %v909, 0.0
        %v913 = vsel %vm911, %v910, 0.0
        %v914 = vadd.f32 %v912, %v913
        %915 = vadd.xlane.f32.xlu0 %v914
        %v916 = vpop.xlane.xlu0 %915
        %v917 = vmul.f32 %v916, 0.00390625
        %v918 = vmul.f32 %v909, %v909
        %v919 = vmul.f32 %v910, %v910
        %v920 = vsel %vm911, %v918, 0.0
        %v921 = vsel %vm911, %v919, 0.0
        %v922 = vadd.f32 %v920, %v921
        %923 = vadd.xlane.f32.xlu0 %v922
        %v924 = vpop.xlane.xlu0 %923
        %v925 = vmul.f32 %v924, 0.00390625
        %v926 = vmul.f32 %v917, %v917
        %v927 = vsub.f32 %v925, %v926
        %v928 = vmax.f32 %v927, 0.0
        %v929 = vsub.f32 %v909, %v917
        %v930 = vsub.f32 %v910, %v917
        %v931 = vadd.f32 %v928, 1e-05
        %v932 = vrsqrt.pop %v931
        %v933 = vmul.f32 %v929, %v932
        %v934 = vmul.f32 %v930, %v932
        %v935 = vmax.f32 %v933, 0.0
        %v936 = vmax.f32 %v934, 0.0
        %937 = vrot.lane.b32.xlu0 %v935, 1
        %v938 = vpop.permute.xlu0 %937
        %939 = vrot.lane.b32.xlu0 %v936, 1
        %v940 = vpop.permute.xlu0 %939
        %v941 = vsel %vm294, %v938, %v940
        %v942 = vsel %vm294, %v940, %v938
        %943 = vrot.lane.b32.xlu0 %v935, 127
        %v944 = vpop.permute.xlu0 %943
        %945 = vrot.lane.b32.xlu0 %v936, 127
        %v946 = vpop.permute.xlu0 %945
        %v947 = vsel %vm301, %v944, %v946
        %v948 = vsel %vm301, %v946, %v944
        %v949 = vsel %vm313, %v947, %v942
        %v950 = vsel %vm314, %v948, %v941
        %951 = vrot.lane.b32.xlu0 %v949, 16
        %v952 = vpop.permute.xlu0 %951
        %953 = vrot.lane.b32.xlu0 %v950, 16
        %v954 = vpop.permute.xlu0 %953
        %v955 = vsel %vm321, %v952, %v954
        %v956 = vsel %vm321, %v954, %v952
        %957 = vrot.lane.b32.xlu0 %v949, 112
        %v958 = vpop.permute.xlu0 %957
        %959 = vrot.lane.b32.xlu0 %v950, 112
        %v960 = vpop.permute.xlu0 %959
        %v961 = vsel %vm328, %v958, %v960
        %v962 = vsel %vm328, %v960, %v958
        %v963 = vsel %vm340, %v961, %v956
        %v964 = vsel %vm341, %v962, %v955
        %v965 = vpack.c.bf16 %v963, %v963
        %v966 = vpack.c.bf16 %v964, %v964
        %v967 = vld [vmem:[%s5] sm:$0x3]
        %v968 = vpack.c.bf16 %v949, %v949
        %v969 = vpack.c.bf16 %v950, %v950
        %s970 = scalar_lea.vmem %s5, 6
        %v971 = vld [vmem:[%s970] sm:$0x3]
        %v973 = vsel %vm351, %v971, 0
        %v976 = vsel %vm355, %v968, 0
        %v979 = vsel %vm355, %v969, 0
        %981 = vmatprep.subr.bf16.mxu0 0
        %982 = vmatpush1.bf16.msra.mxu0 0
        %983 = vmatprep.subr.bf16.mxu0 0
        %984 = vmatpush1.bf16.msra.mxu0 0
        %985 = vmatprep.subr.bf16.mxu0 0
        %986 = vmatpush1.bf16.msra.mxu0 0
        %987 = vmatprep.subr.bf16.mxu0 0
        %988 = vmatpush1.bf16.msra.mxu0 0
        %989 = vmatprep.subr.bf16.mxu0 0
        %990 = vmatpush1.bf16.msra.mxu0 0
        %991 = vmatprep.subr.bf16.mxu0 0
        %992 = vmatpush1.bf16.msra.mxu0 0
        %993 = vmatprep.subr.bf16.mxu0 0
        %994 = vmatpush1.bf16.msra.mxu0 0
        %995 = vmatprep.subr.bf16.mxu0 %v979
        %996 = vmatpush1.bf16.msra.mxu0 %v976
        %997 = vmatprep.subr.bf16.mxu0 0
        %998 = vmatpush2.bf16.msra.mxu0 0
        %999 = vmatprep.subr.bf16.mxu0 0
        %1000 = vmatpush2.bf16.msra.mxu0 0
        %1001 = vmatprep.subr.bf16.mxu0 0
        %1002 = vmatpush2.bf16.msra.mxu0 0
        %1003 = vmatprep.subr.bf16.mxu0 0
        %1004 = vmatpush2.bf16.msra.mxu0 0
        %1005 = vmatprep.subr.bf16.mxu0 0
        %1006 = vmatpush2.bf16.msra.mxu0 0
        %1007 = vmatprep.subr.bf16.mxu0 0
        %1008 = vmatpush2.bf16.msra.mxu0 0
        %1009 = vmatprep.subr.bf16.mxu0 0
        %1010 = vmatpush2.bf16.msra.mxu0 0
        %1011 = vmatprep.subr.bf16.mxu0 0
        %1012 = vmatpush2.bf16.msra.mxu0 0
        %1013 = vmatprep.mubr.bf16.mxu0 0
        %1014 = vmatmul.mubr.bf16.gmra.mxu0 %v973
        %v1015 = vpop.f32.mrf.mxu0
        %v1016 = vadd.f32 0.0, %v1015
        %v1017 = vpop.f32.mrf.mxu0
        %v1018 = vadd.f32 0.0, %v1017
        %v1019 = vpop.f32.mrf.mxu0
        %v1020 = vpop.f32.mrf.mxu0
        %1021 = vdwg.mxu0
        %v1023 = vsel %vm351, %v967, 0
        %v1026 = vsel %vm355, %v965, 0
        %v1029 = vsel %vm355, %v966, 0
        %1031 = vmatprep.subr.bf16.mxu0 0
        %1032 = vmatpush1.bf16.msra.mxu0 0
        %1033 = vmatprep.subr.bf16.mxu0 0
        %1034 = vmatpush1.bf16.msra.mxu0 0
        %1035 = vmatprep.subr.bf16.mxu0 0
        %1036 = vmatpush1.bf16.msra.mxu0 0
        %1037 = vmatprep.subr.bf16.mxu0 0
        %1038 = vmatpush1.bf16.msra.mxu0 0
        %1039 = vmatprep.subr.bf16.mxu0 0
        %1040 = vmatpush1.bf16.msra.mxu0 0
        %1041 = vmatprep.subr.bf16.mxu0 0
        %1042 = vmatpush1.bf16.msra.mxu0 0
        %1043 = vmatprep.subr.bf16.mxu0 0
        %1044 = vmatpush1.bf16.msra.mxu0 0
        %1045 = vmatprep.subr.bf16.mxu0 %v1029
        %1046 = vmatpush1.bf16.msra.mxu0 %v1026
        %1047 = vmatprep.subr.bf16.mxu0 0
        %1048 = vmatpush2.bf16.msra.mxu0 0
        %1049 = vmatprep.subr.bf16.mxu0 0
        %1050 = vmatpush2.bf16.msra.mxu0 0
        %1051 = vmatprep.subr.bf16.mxu0 0
        %1052 = vmatpush2.bf16.msra.mxu0 0
        %1053 = vmatprep.subr.bf16.mxu0 0
        %1054 = vmatpush2.bf16.msra.mxu0 0
        %1055 = vmatprep.subr.bf16.mxu0 0
        %1056 = vmatpush2.bf16.msra.mxu0 0
        %1057 = vmatprep.subr.bf16.mxu0 0
        %1058 = vmatpush2.bf16.msra.mxu0 0
        %1059 = vmatprep.subr.bf16.mxu0 0
        %1060 = vmatpush2.bf16.msra.mxu0 0
        %1061 = vmatprep.subr.bf16.mxu0 0
        %1062 = vmatpush2.bf16.msra.mxu0 0
        %1063 = vmatprep.mubr.bf16.mxu0 0
        %1064 = vmatmul.mubr.bf16.gmra.mxu0 %v1023
        %v1065 = vpop.f32.mrf.mxu0
        %v1066 = vadd.f32 %v1016, %v1065
        %v1067 = vpop.f32.mrf.mxu0
        %v1068 = vadd.f32 %v1018, %v1067
        %v1069 = vpop.f32.mrf.mxu0
        %v1070 = vpop.f32.mrf.mxu0
        %1071 = vdwg.mxu0
        %v1072 = vsel %vm462, %v956, %v961
        %v1073 = vsel %vm463, %v955, %v962
        %v1074 = vpack.c.bf16 %v1072, %v1072
        %v1075 = vpack.c.bf16 %v1073, %v1073
        %s1076 = scalar_lea.vmem %s5, 12
        %v1077 = vld [vmem:[%s1076] sm:$0x3]
        %v1079 = vsel %vm351, %v1077, 0
        %v1082 = vsel %vm355, %v1074, 0
        %v1085 = vsel %vm355, %v1075, 0
        %1087 = vmatprep.subr.bf16.mxu0 0
        %1088 = vmatpush1.bf16.msra.mxu0 0
        %1089 = vmatprep.subr.bf16.mxu0 0
        %1090 = vmatpush1.bf16.msra.mxu0 0
        %1091 = vmatprep.subr.bf16.mxu0 0
        %1092 = vmatpush1.bf16.msra.mxu0 0
        %1093 = vmatprep.subr.bf16.mxu0 0
        %1094 = vmatpush1.bf16.msra.mxu0 0
        %1095 = vmatprep.subr.bf16.mxu0 0
        %1096 = vmatpush1.bf16.msra.mxu0 0
        %1097 = vmatprep.subr.bf16.mxu0 0
        %1098 = vmatpush1.bf16.msra.mxu0 0
        %1099 = vmatprep.subr.bf16.mxu0 0
        %1100 = vmatpush1.bf16.msra.mxu0 0
        %1101 = vmatprep.subr.bf16.mxu0 %v1085
        %1102 = vmatpush1.bf16.msra.mxu0 %v1082
        %1103 = vmatprep.subr.bf16.mxu0 0
        %1104 = vmatpush2.bf16.msra.mxu0 0
        %1105 = vmatprep.subr.bf16.mxu0 0
        %1106 = vmatpush2.bf16.msra.mxu0 0
        %1107 = vmatprep.subr.bf16.mxu0 0
        %1108 = vmatpush2.bf16.msra.mxu0 0
        %1109 = vmatprep.subr.bf16.mxu0 0
        %1110 = vmatpush2.bf16.msra.mxu0 0
        %1111 = vmatprep.subr.bf16.mxu0 0
        %1112 = vmatpush2.bf16.msra.mxu0 0
        %1113 = vmatprep.subr.bf16.mxu0 0
        %1114 = vmatpush2.bf16.msra.mxu0 0
        %1115 = vmatprep.subr.bf16.mxu0 0
        %1116 = vmatpush2.bf16.msra.mxu0 0
        %1117 = vmatprep.subr.bf16.mxu0 0
        %1118 = vmatpush2.bf16.msra.mxu0 0
        %1119 = vmatprep.mubr.bf16.mxu0 0
        %1120 = vmatmul.mubr.bf16.gmra.mxu0 %v1079
        %v1121 = vpop.f32.mrf.mxu0
        %v1122 = vadd.f32 0.0, %v1121
        %v1123 = vpop.f32.mrf.mxu0
        %v1124 = vadd.f32 0.0, %v1123
        %v1125 = vpop.f32.mrf.mxu0
        %v1126 = vpop.f32.mrf.mxu0
        %1127 = vdwg.mxu0
        %v1128 = vadd.f32 %v1066, %v1122
        %v1129 = vadd.f32 %v1068, %v1124
        %1130 = vrot.lane.b32.xlu0 %v935, 16
        %v1131 = vpop.permute.xlu0 %1130
        %1132 = vrot.lane.b32.xlu0 %v936, 16
        %v1133 = vpop.permute.xlu0 %1132
        %v1134 = vsel %vm321, %v1131, %v1133
        %v1135 = vsel %vm321, %v1133, %v1131
        %1136 = vrot.lane.b32.xlu0 %v935, 112
        %v1137 = vpop.permute.xlu0 %1136
        %1138 = vrot.lane.b32.xlu0 %v936, 112
        %v1139 = vpop.permute.xlu0 %1138
        %v1140 = vsel %vm328, %v1137, %v1139
        %v1141 = vsel %vm328, %v1139, %v1137
        %v1142 = vsel %vm340, %v1140, %v1135
        %v1143 = vsel %vm341, %v1141, %v1134
        %v1144 = vpack.c.bf16 %v1142, %v1142
        %v1145 = vpack.c.bf16 %v1143, %v1143
        %s1146 = scalar_lea.vmem %s5, 2
        %v1147 = vld [vmem:[%s1146] sm:$0x3]
        %v1149 = vsel %vm351, %v1147, 0
        %v1152 = vsel %vm355, %v1144, 0
        %v1155 = vsel %vm355, %v1145, 0
        %1157 = vmatprep.subr.bf16.mxu0 0
        %1158 = vmatpush1.bf16.msra.mxu0 0
        %1159 = vmatprep.subr.bf16.mxu0 0
        %1160 = vmatpush1.bf16.msra.mxu0 0
        %1161 = vmatprep.subr.bf16.mxu0 0
        %1162 = vmatpush1.bf16.msra.mxu0 0
        %1163 = vmatprep.subr.bf16.mxu0 0
        %1164 = vmatpush1.bf16.msra.mxu0 0
        %1165 = vmatprep.subr.bf16.mxu0 0
        %1166 = vmatpush1.bf16.msra.mxu0 0
        %1167 = vmatprep.subr.bf16.mxu0 0
        %1168 = vmatpush1.bf16.msra.mxu0 0
        %1169 = vmatprep.subr.bf16.mxu0 0
        %1170 = vmatpush1.bf16.msra.mxu0 0
        %1171 = vmatprep.subr.bf16.mxu0 %v1155
        %1172 = vmatpush1.bf16.msra.mxu0 %v1152
        %1173 = vmatprep.subr.bf16.mxu0 0
        %1174 = vmatpush2.bf16.msra.mxu0 0
        %1175 = vmatprep.subr.bf16.mxu0 0
        %1176 = vmatpush2.bf16.msra.mxu0 0
        %1177 = vmatprep.subr.bf16.mxu0 0
        %1178 = vmatpush2.bf16.msra.mxu0 0
        %1179 = vmatprep.subr.bf16.mxu0 0
        %1180 = vmatpush2.bf16.msra.mxu0 0
        %1181 = vmatprep.subr.bf16.mxu0 0
        %1182 = vmatpush2.bf16.msra.mxu0 0
        %1183 = vmatprep.subr.bf16.mxu0 0
        %1184 = vmatpush2.bf16.msra.mxu0 0
        %1185 = vmatprep.subr.bf16.mxu0 0
        %1186 = vmatpush2.bf16.msra.mxu0 0
        %1187 = vmatprep.subr.bf16.mxu0 0
        %1188 = vmatpush2.bf16.msra.mxu0 0
        %1189 = vmatprep.mubr.bf16.mxu0 0
        %1190 = vmatmul.mubr.bf16.gmra.mxu0 %v1149
        %v1191 = vpop.f32.mrf.mxu0
        %v1192 = vadd.f32 0.0, %v1191
        %v1193 = vpop.f32.mrf.mxu0
        %v1194 = vadd.f32 0.0, %v1193
        %v1195 = vpop.f32.mrf.mxu0
        %v1196 = vpop.f32.mrf.mxu0
        %1197 = vdwg.mxu0
        %v1198 = vadd.f32 %v1128, %v1192
        %v1199 = vadd.f32 %v1129, %v1194
        %v1200 = vpack.c.bf16 %v935, %v935
        %v1201 = vpack.c.bf16 %v936, %v936
        %s1202 = scalar_lea.vmem %s5, 8
        %v1203 = vld [vmem:[%s1202] sm:$0x3]
        %v1205 = vsel %vm351, %v1203, 0
        %v1208 = vsel %vm355, %v1200, 0
        %v1211 = vsel %vm355, %v1201, 0
        %1213 = vmatprep.subr.bf16.mxu0 0
        %1214 = vmatpush1.bf16.msra.mxu0 0
        %1215 = vmatprep.subr.bf16.mxu0 0
        %1216 = vmatpush1.bf16.msra.mxu0 0
        %1217 = vmatprep.subr.bf16.mxu0 0
        %1218 = vmatpush1.bf16.msra.mxu0 0
        %1219 = vmatprep.subr.bf16.mxu0 0
        %1220 = vmatpush1.bf16.msra.mxu0 0
        %1221 = vmatprep.subr.bf16.mxu0 0
        %1222 = vmatpush1.bf16.msra.mxu0 0
        %1223 = vmatprep.subr.bf16.mxu0 0
        %1224 = vmatpush1.bf16.msra.mxu0 0
        %1225 = vmatprep.subr.bf16.mxu0 0
        %1226 = vmatpush1.bf16.msra.mxu0 0
        %1227 = vmatprep.subr.bf16.mxu0 %v1211
        %1228 = vmatpush1.bf16.msra.mxu0 %v1208
        %1229 = vmatprep.subr.bf16.mxu0 0
        %1230 = vmatpush2.bf16.msra.mxu0 0
        %1231 = vmatprep.subr.bf16.mxu0 0
        %1232 = vmatpush2.bf16.msra.mxu0 0
        %1233 = vmatprep.subr.bf16.mxu0 0
        %1234 = vmatpush2.bf16.msra.mxu0 0
        %1235 = vmatprep.subr.bf16.mxu0 0
        %1236 = vmatpush2.bf16.msra.mxu0 0
        %1237 = vmatprep.subr.bf16.mxu0 0
        %1238 = vmatpush2.bf16.msra.mxu0 0
        %1239 = vmatprep.subr.bf16.mxu0 0
        %1240 = vmatpush2.bf16.msra.mxu0 0
        %1241 = vmatprep.subr.bf16.mxu0 0
        %1242 = vmatpush2.bf16.msra.mxu0 0
        %1243 = vmatprep.subr.bf16.mxu0 0
        %1244 = vmatpush2.bf16.msra.mxu0 0
        %1245 = vmatprep.mubr.bf16.mxu0 0
        %1246 = vmatmul.mubr.bf16.gmra.mxu0 %v1205
        %v1247 = vpop.f32.mrf.mxu0
        %v1248 = vadd.f32 0.0, %v1247
        %v1249 = vpop.f32.mrf.mxu0
        %v1250 = vadd.f32 0.0, %v1249
        %v1251 = vpop.f32.mrf.mxu0
        %v1252 = vpop.f32.mrf.mxu0
        %1253 = vdwg.mxu0
        %v1254 = vadd.f32 %v1198, %v1248
        %v1255 = vadd.f32 %v1199, %v1250
        %v1256 = vsel %vm462, %v1135, %v1140
        %v1257 = vsel %vm463, %v1134, %v1141
        %v1258 = vpack.c.bf16 %v1256, %v1256
        %v1259 = vpack.c.bf16 %v1257, %v1257
        %s1260 = scalar_lea.vmem %s5, 14
        %v1261 = vld [vmem:[%s1260] sm:$0x3]
        %v1263 = vsel %vm351, %v1261, 0
        %v1266 = vsel %vm355, %v1258, 0
        %v1269 = vsel %vm355, %v1259, 0
        %1271 = vmatprep.subr.bf16.mxu0 0
        %1272 = vmatpush1.bf16.msra.mxu0 0
        %1273 = vmatprep.subr.bf16.mxu0 0
        %1274 = vmatpush1.bf16.msra.mxu0 0
        %1275 = vmatprep.subr.bf16.mxu0 0
        %1276 = vmatpush1.bf16.msra.mxu0 0
        %1277 = vmatprep.subr.bf16.mxu0 0
        %1278 = vmatpush1.bf16.msra.mxu0 0
        %1279 = vmatprep.subr.bf16.mxu0 0
        %1280 = vmatpush1.bf16.msra.mxu0 0
        %1281 = vmatprep.subr.bf16.mxu0 0
        %1282 = vmatpush1.bf16.msra.mxu0 0
        %1283 = vmatprep.subr.bf16.mxu0 0
        %1284 = vmatpush1.bf16.msra.mxu0 0
        %1285 = vmatprep.subr.bf16.mxu0 %v1269
        %1286 = vmatpush1.bf16.msra.mxu0 %v1266
        %1287 = vmatprep.subr.bf16.mxu0 0
        %1288 = vmatpush2.bf16.msra.mxu0 0
        %1289 = vmatprep.subr.bf16.mxu0 0
        %1290 = vmatpush2.bf16.msra.mxu0 0
        %1291 = vmatprep.subr.bf16.mxu0 0
        %1292 = vmatpush2.bf16.msra.mxu0 0
        %1293 = vmatprep.subr.bf16.mxu0 0
        %1294 = vmatpush2.bf16.msra.mxu0 0
        %1295 = vmatprep.subr.bf16.mxu0 0
        %1296 = vmatpush2.bf16.msra.mxu0 0
        %1297 = vmatprep.subr.bf16.mxu0 0
        %1298 = vmatpush2.bf16.msra.mxu0 0
        %1299 = vmatprep.subr.bf16.mxu0 0
        %1300 = vmatpush2.bf16.msra.mxu0 0
        %1301 = vmatprep.subr.bf16.mxu0 0
        %1302 = vmatpush2.bf16.msra.mxu0 0
        %1303 = vmatprep.mubr.bf16.mxu0 0
        %1304 = vmatmul.mubr.bf16.gmra.mxu0 %v1263
        %v1305 = vpop.f32.mrf.mxu0
        %v1306 = vadd.f32 0.0, %v1305
        %v1307 = vpop.f32.mrf.mxu0
        %v1308 = vadd.f32 0.0, %v1307
        %v1309 = vpop.f32.mrf.mxu0
        %v1310 = vpop.f32.mrf.mxu0
        %1311 = vdwg.mxu0
        %v1312 = vadd.f32 %v1254, %v1306
        %v1313 = vadd.f32 %v1255, %v1308
        %v1314 = vsel %vm715, %v942, %v947
        %v1315 = vsel %vm716, %v941, %v948
        %1316 = vrot.lane.b32.xlu0 %v1314, 16
        %v1317 = vpop.permute.xlu0 %1316
        %1318 = vrot.lane.b32.xlu0 %v1315, 16
        %v1319 = vpop.permute.xlu0 %1318
        %v1320 = vsel %vm321, %v1317, %v1319
        %v1321 = vsel %vm321, %v1319, %v1317
        %1322 = vrot.lane.b32.xlu0 %v1314, 112
        %v1323 = vpop.permute.xlu0 %1322
        %1324 = vrot.lane.b32.xlu0 %v1315, 112
        %v1325 = vpop.permute.xlu0 %1324
        %v1326 = vsel %vm328, %v1323, %v1325
        %v1327 = vsel %vm328, %v1325, %v1323
        %v1328 = vsel %vm340, %v1326, %v1321
        %v1329 = vsel %vm341, %v1327, %v1320
        %v1330 = vpack.c.bf16 %v1328, %v1328
        %v1331 = vpack.c.bf16 %v1329, %v1329
        %s1332 = scalar_lea.vmem %s5, 4
        %v1333 = vld [vmem:[%s1332] sm:$0x3]
        %v1335 = vsel %vm351, %v1333, 0
        %v1338 = vsel %vm355, %v1330, 0
        %v1341 = vsel %vm355, %v1331, 0
        %1343 = vmatprep.subr.bf16.mxu0 0
        %1344 = vmatpush1.bf16.msra.mxu0 0
        %1345 = vmatprep.subr.bf16.mxu0 0
        %1346 = vmatpush1.bf16.msra.mxu0 0
        %1347 = vmatprep.subr.bf16.mxu0 0
        %1348 = vmatpush1.bf16.msra.mxu0 0
        %1349 = vmatprep.subr.bf16.mxu0 0
        %1350 = vmatpush1.bf16.msra.mxu0 0
        %1351 = vmatprep.subr.bf16.mxu0 0
        %1352 = vmatpush1.bf16.msra.mxu0 0
        %1353 = vmatprep.subr.bf16.mxu0 0
        %1354 = vmatpush1.bf16.msra.mxu0 0
        %1355 = vmatprep.subr.bf16.mxu0 0
        %1356 = vmatpush1.bf16.msra.mxu0 0
        %1357 = vmatprep.subr.bf16.mxu0 %v1341
        %1358 = vmatpush1.bf16.msra.mxu0 %v1338
        %1359 = vmatprep.subr.bf16.mxu0 0
        %1360 = vmatpush2.bf16.msra.mxu0 0
        %1361 = vmatprep.subr.bf16.mxu0 0
        %1362 = vmatpush2.bf16.msra.mxu0 0
        %1363 = vmatprep.subr.bf16.mxu0 0
        %1364 = vmatpush2.bf16.msra.mxu0 0
        %1365 = vmatprep.subr.bf16.mxu0 0
        %1366 = vmatpush2.bf16.msra.mxu0 0
        %1367 = vmatprep.subr.bf16.mxu0 0
        %1368 = vmatpush2.bf16.msra.mxu0 0
        %1369 = vmatprep.subr.bf16.mxu0 0
        %1370 = vmatpush2.bf16.msra.mxu0 0
        %1371 = vmatprep.subr.bf16.mxu0 0
        %1372 = vmatpush2.bf16.msra.mxu0 0
        %1373 = vmatprep.subr.bf16.mxu0 0
        %1374 = vmatpush2.bf16.msra.mxu0 0
        %1375 = vmatprep.mubr.bf16.mxu0 0
        %1376 = vmatmul.mubr.bf16.gmra.mxu0 %v1335
        %v1377 = vpop.f32.mrf.mxu0
        %v1378 = vadd.f32 0.0, %v1377
        %v1379 = vpop.f32.mrf.mxu0
        %v1380 = vadd.f32 0.0, %v1379
        %v1381 = vpop.f32.mrf.mxu0
        %v1382 = vpop.f32.mrf.mxu0
        %1383 = vdwg.mxu0
        %v1384 = vadd.f32 %v1312, %v1378
        %v1385 = vadd.f32 %v1313, %v1380
        %v1386 = vpack.c.bf16 %v1314, %v1314
        %v1387 = vpack.c.bf16 %v1315, %v1315
        %s1388 = scalar_lea.vmem %s5, 10
        %v1389 = vld [vmem:[%s1388] sm:$0x3]
        %v1391 = vsel %vm351, %v1389, 0
        %v1394 = vsel %vm355, %v1386, 0
        %v1397 = vsel %vm355, %v1387, 0
        %1399 = vmatprep.subr.bf16.mxu0 0
        %1400 = vmatpush1.bf16.msra.mxu0 0
        %1401 = vmatprep.subr.bf16.mxu0 0
        %1402 = vmatpush1.bf16.msra.mxu0 0
        %1403 = vmatprep.subr.bf16.mxu0 0
        %1404 = vmatpush1.bf16.msra.mxu0 0
        %1405 = vmatprep.subr.bf16.mxu0 0
        %1406 = vmatpush1.bf16.msra.mxu0 0
        %1407 = vmatprep.subr.bf16.mxu0 0
        %1408 = vmatpush1.bf16.msra.mxu0 0
        %1409 = vmatprep.subr.bf16.mxu0 0
        %1410 = vmatpush1.bf16.msra.mxu0 0
        %1411 = vmatprep.subr.bf16.mxu0 0
        %1412 = vmatpush1.bf16.msra.mxu0 0
        %1413 = vmatprep.subr.bf16.mxu0 %v1397
        %1414 = vmatpush1.bf16.msra.mxu0 %v1394
        %1415 = vmatprep.subr.bf16.mxu0 0
        %1416 = vmatpush2.bf16.msra.mxu0 0
        %1417 = vmatprep.subr.bf16.mxu0 0
        %1418 = vmatpush2.bf16.msra.mxu0 0
        %1419 = vmatprep.subr.bf16.mxu0 0
        %1420 = vmatpush2.bf16.msra.mxu0 0
        %1421 = vmatprep.subr.bf16.mxu0 0
        %1422 = vmatpush2.bf16.msra.mxu0 0
        %1423 = vmatprep.subr.bf16.mxu0 0
        %1424 = vmatpush2.bf16.msra.mxu0 0
        %1425 = vmatprep.subr.bf16.mxu0 0
        %1426 = vmatpush2.bf16.msra.mxu0 0
        %1427 = vmatprep.subr.bf16.mxu0 0
        %1428 = vmatpush2.bf16.msra.mxu0 0
        %1429 = vmatprep.subr.bf16.mxu0 0
        %1430 = vmatpush2.bf16.msra.mxu0 0
        %1431 = vmatprep.mubr.bf16.mxu0 0
        %1432 = vmatmul.mubr.bf16.gmra.mxu0 %v1391
        %v1433 = vpop.f32.mrf.mxu0
        %v1434 = vadd.f32 0.0, %v1433
        %v1435 = vpop.f32.mrf.mxu0
        %v1436 = vadd.f32 0.0, %v1435
        %v1437 = vpop.f32.mrf.mxu0
        %v1438 = vpop.f32.mrf.mxu0
        %1439 = vdwg.mxu0
        %v1440 = vadd.f32 %v1384, %v1434
        %v1441 = vadd.f32 %v1385, %v1436
        %v1442 = vsel %vm462, %v1321, %v1326
        %v1443 = vsel %vm463, %v1320, %v1327
        %v1444 = vpack.c.bf16 %v1442, %v1442
        %v1445 = vpack.c.bf16 %v1443, %v1443
        %s1446 = scalar_lea.vmem %s5, 16
        %v1447 = vld [vmem:[%s1446] sm:$0x3]
        %v1449 = vsel %vm351, %v1447, 0
        %v1452 = vsel %vm355, %v1444, 0
        %v1455 = vsel %vm355, %v1445, 0
        %1457 = vmatprep.subr.bf16.mxu0 0
        %1458 = vmatpush1.bf16.msra.mxu0 0
        %1459 = vmatprep.subr.bf16.mxu0 0
        %1460 = vmatpush1.bf16.msra.mxu0 0
        %1461 = vmatprep.subr.bf16.mxu0 0
        %1462 = vmatpush1.bf16.msra.mxu0 0
        %1463 = vmatprep.subr.bf16.mxu0 0
        %1464 = vmatpush1.bf16.msra.mxu0 0
        %1465 = vmatprep.subr.bf16.mxu0 0
        %1466 = vmatpush1.bf16.msra.mxu0 0
        %1467 = vmatprep.subr.bf16.mxu0 0
        %1468 = vmatpush1.bf16.msra.mxu0 0
        %1469 = vmatprep.subr.bf16.mxu0 0
        %1470 = vmatpush1.bf16.msra.mxu0 0
        %1471 = vmatprep.subr.bf16.mxu0 %v1455
        %1472 = vmatpush1.bf16.msra.mxu0 %v1452
        %1473 = vmatprep.subr.bf16.mxu0 0
        %1474 = vmatpush2.bf16.msra.mxu0 0
        %1475 = vmatprep.subr.bf16.mxu0 0
        %1476 = vmatpush2.bf16.msra.mxu0 0
        %1477 = vmatprep.subr.bf16.mxu0 0
        %1478 = vmatpush2.bf16.msra.mxu0 0
        %1479 = vmatprep.subr.bf16.mxu0 0
        %1480 = vmatpush2.bf16.msra.mxu0 0
        %1481 = vmatprep.subr.bf16.mxu0 0
        %1482 = vmatpush2.bf16.msra.mxu0 0
        %1483 = vmatprep.subr.bf16.mxu0 0
        %1484 = vmatpush2.bf16.msra.mxu0 0
        %1485 = vmatprep.subr.bf16.mxu0 0
        %1486 = vmatpush2.bf16.msra.mxu0 0
        %1487 = vmatprep.subr.bf16.mxu0 0
        %1488 = vmatpush2.bf16.msra.mxu0 0
        %1489 = vmatprep.mubr.bf16.mxu0 0
        %1490 = vmatmul.mubr.bf16.gmra.mxu0 %v1449
        %v1491 = vpop.f32.mrf.mxu0
        %v1492 = vadd.f32 0.0, %v1491
        %v1493 = vpop.f32.mrf.mxu0
        %v1494 = vadd.f32 0.0, %v1493
        %v1495 = vpop.f32.mrf.mxu0
        %v1496 = vpop.f32.mrf.mxu0
        %1497 = vdwg.mxu0
        %v1498 = vadd.f32 %v1440, %v1492
        %v1499 = vadd.f32 %v1441, %v1494
        %v1500 = vld [vmem:[%s6] sm:$0xf]
        %1502 = vset.pattern.permute.xlu0 0
        %1503 = vperm.xlu0 %1502, %v1500
        %v1504 = vpop.permute.xlu0 %1503
        %v1506 = vadd.f32 %v1498, %v1504
        %v1507 = vadd.f32 %v1499, %v1504
        %v1508 = vsel %vm911, %v1506, 0.0
        %v1509 = vsel %vm911, %v1507, 0.0
        %v1510 = vadd.f32 %v1508, %v1509
        %1511 = vadd.xlane.f32.xlu0 %v1510
        %v1512 = vpop.xlane.xlu0 %1511
        %v1513 = vmul.f32 %v1512, 0.00390625
        %v1514 = vmul.f32 %v1506, %v1506
        %v1515 = vmul.f32 %v1507, %v1507
        %v1516 = vsel %vm911, %v1514, 0.0
        %v1517 = vsel %vm911, %v1515, 0.0
        %v1518 = vadd.f32 %v1516, %v1517
        %1519 = vadd.xlane.f32.xlu0 %v1518
        %v1520 = vpop.xlane.xlu0 %1519
        %v1521 = vmul.f32 %v1520, 0.00390625
        %v1522 = vmul.f32 %v1513, %v1513
        %v1523 = vsub.f32 %v1521, %v1522
        %v1524 = vmax.f32 %v1523, 0.0
        %v1525 = vsub.f32 %v1506, %v1513
        %v1526 = vsub.f32 %v1507, %v1513
        %v1527 = vadd.f32 %v1524, 1e-05
        %v1528 = vrsqrt.pop %v1527
        %v1529 = vmul.f32 %v1525, %v1528
        %v1530 = vmul.f32 %v1526, %v1528
        %v1533 = vcombine.low %v1529, %v1530
        %v1535 = vadd.f32 %v278, %v1533
        %1536 = vst [vmem:[%s271] sm:$0xff] %v1535
        %s1537 = sand.u32 %s181, 1
        %s1538 = scalar_lea.sflag [#allocation3], %s1537
        %s1539 = sand.u32 %s181, 1
        %s1540 = smul.addr %s1539, 8
        %s1541 = scalar_lea.vmem [#allocation2], %s1540
        // Predicated region
        $region49: #{tpu_custom_call.1} parent=47 // pred_check
          %p1542 = pneg %p191
        $region50: #{tpu_custom_call.1} parent=47 // pred_check_branch
          %1544 = sbr.rel (%p1542) target = $region52
        $region51: #{tpu_custom_call.1} parent=47 // pred_region
          %s1546 = ssub.s32 128, 128
          %1547 = vsyncadd %s1538, %s1546
          %s1548 = smul.addr %s21, 2
          %s1549 = smul.addr %s1548, 64
          %s1550 = scalar_lea.hbm %s7, %s1549
          %s1552 = sshll.u32 %s1541, 4
          %s1553 = int_to_ptr.vmem [resolvable:$true] %s1552
          %1555 = dma.vmem_to_hbm [thread:$0]  %s1553, 128, %s1550, %s1538
        $region52: #{tpu_custom_call.1} parent=47 // pred_fallthru
          _
      $region48: #{tpu_custom_call.1} parent=5 // pred_fallthru
        _
      %p1556 = scmp.le.s32.totalorder 2, %s16
      // Predicated region
      $region53: #{tpu_custom_call.1} parent=5 // pred_check
        %p1557 = pneg %p1556
      $region54: #{tpu_custom_call.1} parent=5 // pred_check_branch
        %1559 = sbr.rel (%p1557) target = $region56
      $region55: #{tpu_custom_call.1} parent=5 // pred_region
        %s1560 = ssub.s32 %s16, 2
        // Predicated region
        $region57: #{tpu_custom_call.1} parent=55 // pred_check
          %p1561 = pneg %p197
        $region58: #{tpu_custom_call.1} parent=55 // pred_check_branch
          %1563 = sbr.rel (%p1561) target = $region60
        $region59: #{tpu_custom_call.1} parent=55 // pred_region
          %s1564 = sand.u32 %s182, 1
          %s1565 = scalar_lea.sflag [#allocation3], %s1564
          %s1566 = sand.u32 %s182, 1
          %s1567 = smul.addr %s1566, 8
          %s1568 = scalar_lea.vmem [#allocation2], %s1567
          %1569 = dma.done %s1565, 128
        $region60: #{tpu_custom_call.1} parent=55 // pred_fallthru
          _
      $region56: #{tpu_custom_call.1} parent=5 // pred_fallthru
        _
    $region6: #{tpu_custom_call.1} parent=1 // loop_footer
      %s20 = sadd.s32 1, %s16
    $region7: #{tpu_custom_call.1} parent=1 // loop_footer_branch
      %15 = sbr.rel target = $region3
    $region8: #{tpu_custom_call.1} parent=1 // loop_exit
      _
    %1570 = vsyncpa [#allocation3], 1
    %s1571 = scalar_lea.sflag [#allocation3], 1
    %1572 = vsyncpa %s1571, 1

</llo_original>
